<compile_context>
chip_gen: v6e
topology: v6e:2x2x1
jax: 0.10.0
libtpu: 0.0.40
codegen_flags: <defaults>
</compile_context>

<pallas_src>
import functools
import math

import jax
import jax.numpy as jnp
from jax.experimental import pallas as pl
from jax.experimental.pallas import tpu as pltpu

# ---- hyperparameters implied by the module (model_type='s') ----
INPUT_DIM = 4        # len(args.input_column)  -> number of tokens
OUTPUT_DIM = 2       # len(args.output_column)
INPUT_SIZE = 16      # args.input_size
OUTPUT_SIZE = 8      # args.output_size
FEATURE = 128        # n_dict['s']
NUM_HEADS = 8
HEAD_DIM = FEATURE // NUM_HEADS
LN_EPS = 1e-5

MATMUL_DTYPE = jnp.bfloat16


# ---------------- in-kernel helpers (fp32 math) ----------------

def _layernorm(x, gamma, beta):
    mu = jnp.mean(x, axis=-1, keepdims=True)
    var = jnp.mean((x - mu) ** 2, axis=-1, keepdims=True)
    return (x - mu) * jax.lax.rsqrt(var + LN_EPS) * gamma + beta


def _gelu(x):
    # TODO(synk): torch.nn.GELU() default is the exact erf form; tanh (EUP)
    # approximation is used here for robust Mosaic lowering.
    c = math.sqrt(2.0 / math.pi)
    return 0.5 * x * (1.0 + jnp.tanh(c * (x + 0.044715 * x * x * x)))


# ---------------- fused kernel ----------------

def itransformer_kernel(x_ref, w0_ref, b0_ref, wenc_ref, bqkv_ref, vec_ref,
                        shsum_ref, whead_ref, bhead_ref, o_ref):
    rows, _ = x_ref.shape
    N = INPUT_DIM
    TB = rows // N

    # l0: Linear(input_size -> feature) on all tokens of the batch tile.
    h = jnp.dot(x_ref[...].astype(MATMUL_DTYPE), w0_ref[...],
                preferred_element_type=jnp.float32) + b0_ref[...]

    # Constant (128,128) fp32 block matrix: S[f,g] = 1 iff f,g in same head.
    # prod @ S = per-head q.k sums, already replicated across each head's
    # 16 lanes -> lane-parallel softmax, no head loop / slices / concat.
    s_hsum = shsum_ref[...]

    # l1, l2: encoder blocks (activations stay resident in VMEM/vregs).
    for e in range(2):
        wqkv = wenc_ref[e, :, 0:3 * FEATURE]            # (128, 384) bf16
        wo = wenc_ref[e, :, 3 * FEATURE:4 * FEATURE]    # (128, 128) bf16
        wc0 = wenc_ref[e, :, 4 * FEATURE:5 * FEATURE]
        wc1 = wenc_ref[e, :, 5 * FEATURE:6 * FEATURE]
        bqkv = bqkv_ref[e]                              # (1, 384) fp32
        bo = vec_ref[e, 0:1, :]
        bc0 = vec_ref[e, 1:2, :]
        bc1 = vec_ref[e, 2:3, :]
        g0 = vec_ref[e, 3:4, :]
        be0 = vec_ref[e, 4:5, :]
        g1 = vec_ref[e, 5:6, :]
        be1 = vec_ref[e, 6:7, :]

        # Fused Q/K/V projection (rows, 128) @ (128, 384).  The 1/sqrt(D)
        # scale is pre-folded into the q third of wqkv/bqkv on the host.
        qkv = jnp.dot(h.astype(MATMUL_DTYPE), wqkv,
                      preferred_element_type=jnp.float32) + bqkv
        q3 = qkv[:, 0:FEATURE].reshape(TB, N, FEATURE)
        k3 = qkv[:, FEATURE:2 * FEATURE].reshape(TB, N, FEATURE)
        v3 = qkv[:, 2 * FEATURE:3 * FEATURE].reshape(TB, N, FEATURE)

        # Lane-dense multi-head attention (N = 4 tokens):
        #   prod[b,i,j,:] = q_i * k_j            (VPU, broadcast multiply)
        #   lg[b,i,j,f]   = logits of head(f)    (one matmul with s_hsum)
        #   softmax over j, per lane             (identical within a head)
        #   ctx[b,i,:]    = sum_j p * v_j        (VPU + sublane reduce)
        prod = q3[:, :, None, :] * k3[:, None, :, :]       # (TB, N, N, 128)
        lg = jnp.dot(prod.reshape(TB * N * N, FEATURE), s_hsum,
                     preferred_element_type=jnp.float32)
        lg = lg.reshape(TB, N, N, FEATURE)
        m = jnp.max(lg, axis=2, keepdims=True)
        ex = jnp.exp(lg - m)
        p = ex / jnp.sum(ex, axis=2, keepdims=True)
        ctx = jnp.sum(p * v3[:, None, :, :], axis=2).reshape(rows, FEATURE)

        attn = jnp.dot(ctx.astype(MATMUL_DTYPE), wo,
                       preferred_element_type=jnp.float32) + bo

        # residual + LayerNorm0 (dropout = identity in eval mode)
        h0 = _layernorm(h + attn, g0, be0)

        # 1x1 Conv1d pair == per-token MLP on the feature axis
        f = jnp.dot(h0.astype(MATMUL_DTYPE), wc0,
                    preferred_element_type=jnp.float32) + bc0
        f = _gelu(f)
        f = jnp.dot(f.astype(MATMUL_DTYPE), wc1,
                    preferred_element_type=jnp.float32) + bc1
        h = _layernorm(h0 + f, g1, be1)

    # l3 + l4: the token mix (w3) and split_linear (w4) are folded host-side
    # into ONE (N*FEATURE, OUTPUT_DIM*OUTPUT_SIZE) matmul; b3/b4 folded into
    # its bias.  Lane-dense (TB, 16) store, reshaped outside the kernel.
    out = jnp.dot(h.reshape(TB, N * FEATURE).astype(MATMUL_DTYPE),
                  whead_ref[...], preferred_element_type=jnp.float32)
    out = out + bhead_ref[...]
    o_ref[...] = out.astype(o_ref.dtype)


# ---------------- wrapper ----------------

@functools.lru_cache(maxsize=None)
def _tb_cap():
    """Generation-aware batch-tile cap (v7x has 64 MiB VMEM, v5e/v6e 128)."""
    try:
        vmem = int(pltpu.get_tpu_info().vmem_capacity_bytes)
    except Exception:
        return 256
    return 512 if vmem >= (100 << 20) else 256


def _pick_tb(B, cap):
    """Batch-tile size: multiple of 8, grid >= 2 for B > 8 (v7x 2 TCs)."""
    if B <= 8:
        return B
    half = -(-B // 2)
    return min(cap, -(-half // 8) * 8)


@jax.jit
def itransformer_forward(x, params):
    B, N, S = x.shape
    cap = _tb_cap()
    TB = _pick_tb(B, cap)
    B_pad = -(-B // TB) * TB
    if B_pad != B:
        x = jnp.pad(x, ((0, B_pad - B), (0, 0), (0, 0)))
    x_flat = x.reshape(B_pad * N, S)          # dense DMA, no in-kernel repack

    consts = [params['w0'], params['b0'], params['wenc'], params['bqkv'],
              params['vec'], params['s_hsum'], params['w_head'],
              params['b_head']]

    def _const_spec(a):
        nd = a.ndim
        return pl.BlockSpec(a.shape, lambda i, _nd=nd: (0,) * _nd)

    rows = B_pad * N
    out_cols = OUTPUT_DIM * OUTPUT_SIZE
    flops = (2 * rows * INPUT_SIZE * FEATURE
             + 2 * (2 * rows * FEATURE * 3 * FEATURE                 # qkv
                    + 2 * (B_pad * N * N) * FEATURE * FEATURE        # head-sum
                    + 3 * 2 * rows * FEATURE * FEATURE)              # wo/wc0/wc1
             + 2 * B_pad * (N * FEATURE) * out_cols)
    transcendentals = 2 * B_pad * N * N * FEATURE + 2 * rows * FEATURE
    bytes_accessed = (int(x_flat.size) * x_flat.dtype.itemsize
                      + sum(int(a.size) * a.dtype.itemsize for a in consts)
                      + B_pad * out_cols * 4)

    out = pl.pallas_call(
        itransformer_kernel,
        out_shape=jax.ShapeDtypeStruct((B_pad, out_cols), x.dtype),
        grid=(B_pad // TB,),
        in_specs=[pl.BlockSpec((TB * N, S), lambda i: (i, 0))]
                 + [_const_spec(a) for a in consts],
        out_specs=pl.BlockSpec((TB, out_cols), lambda i: (i, 0)),
        compiler_params=pltpu.CompilerParams(
            dimension_semantics=("parallel",),
            vmem_limit_bytes=(96 << 20) if cap >= 512 else (48 << 20)),
        cost_estimate=pl.CostEstimate(flops=int(flops),
                                      transcendentals=int(transcendentals),
                                      bytes_accessed=int(bytes_accessed)),
    )(x_flat, *consts)
    return out[:B].reshape(B, OUTPUT_DIM, OUTPUT_SIZE)


# ---------------- deterministic parameter init / packing ----------------

def init_params(key):
    keys = iter(jax.random.split(key, 64))

    def w(shape, scale=0.05):
        return scale * jax.random.normal(next(keys), shape, jnp.float32)

    def enc_params():
        p = {}
        for name in ('wq', 'wk', 'wv', 'wo', 'wc0', 'wc1'):
            p[name] = w((FEATURE, FEATURE))
        for name in ('bq', 'bk', 'bv', 'bo', 'bc0', 'bc1'):
            p[name] = w((1, FEATURE), 0.02)
        p['g0'] = jnp.ones((1, FEATURE), jnp.float32)
        p['be0'] = jnp.zeros((1, FEATURE), jnp.float32)
        p['g1'] = jnp.ones((1, FEATURE), jnp.float32)
        p['be1'] = jnp.zeros((1, FEATURE), jnp.float32)
        return p

    return {
        'w0': w((INPUT_SIZE, FEATURE)),
        'b0': w((1, FEATURE), 0.02),
        'enc1': enc_params(),
        'enc2': enc_params(),
        'w3': w((OUTPUT_DIM, INPUT_DIM)),
        'b3': w((OUTPUT_DIM, 1), 0.02),
        'w4': w((OUTPUT_DIM, FEATURE, OUTPUT_SIZE)),
        'b4': w((OUTPUT_DIM, OUTPUT_SIZE), 0.02),
    }


def pack_params(p):
    """Kernel-ready params: fused QKV, stacked encoder tensors, folded head."""
    scale = 1.0 / math.sqrt(HEAD_DIM)

    def enc_pack(e):
        wqkv = jnp.concatenate([e['wq'] * scale, e['wk'], e['wv']], axis=1)
        W = jnp.concatenate([wqkv, e['wo'], e['wc0'], e['wc1']],
                            axis=1).astype(MATMUL_DTYPE)          # (128, 768)
        bqkv = jnp.concatenate([e['bq'] * scale, e['bk'], e['bv']], axis=1)
        vec = jnp.concatenate([e['bo'], e['bc0'], e['bc1'],
                               e['g0'], e['be0'], e['g1'], e['be1'],
                               jnp.zeros((1, FEATURE), jnp.float32)], axis=0)
        return W, bqkv.reshape(1, 3 * FEATURE), vec               # vec (8,128)

    W1, bqkv1, vec1 = enc_pack(p['enc1'])
    W2, bqkv2, vec2 = enc_pack(p['enc2'])

    # Head-sum / lane-expand matrix: 16x16 ones blocks on the diagonal.
    hid = jnp.arange(FEATURE) // HEAD_DIM
    s_hsum = (hid[:, None] == hid[None, :]).astype(jnp.float32)   # (128, 128)

    # Fold l3 (token mix) and l4 (split_linear) into one matmul:
    #   W_full[n*F+f, c*O+o] = w3[c,n] * w4[c,f,o]
    #   b_head[c, o]         = b3[c] * sum_f w4[c,f,o] + b4[c,o]
    w_full = jnp.einsum('cn,cfo->nfco', p['w3'], p['w4']).reshape(
        INPUT_DIM * FEATURE, OUTPUT_DIM * OUTPUT_SIZE)
    b_head = (p['b3'] * jnp.sum(p['w4'], axis=1) + p['b4']).reshape(
        1, OUTPUT_DIM * OUTPUT_SIZE)

    return {
        'w0': p['w0'].astype(MATMUL_DTYPE), 'b0': p['b0'],
        'wenc': jnp.stack([W1, W2]),                # (2, 128, 768) bf16
        'bqkv': jnp.stack([bqkv1, bqkv2]),          # (2, 1, 384)  fp32
        'vec': jnp.stack([vec1, vec2]),             # (2, 8, 128)  fp32
        's_hsum': s_hsum,                           # (128, 128)   fp32
        'w_head': w_full.astype(MATMUL_DTYPE),      # (512, 16)    bf16
        'b_head': b_head,                           # (1, 16)      fp32
    }


# ---------------- pure-JAX reference (same packed params, per-head MHA) ----

def _reference_forward(x, pp):
    B, N, S = x.shape

    def mm(a, w):
        return jnp.dot(a.astype(MATMUL_DTYPE), w,
                       preferred_element_type=jnp.float32)

    h = mm(x.reshape(B * N, S), pp['w0']) + pp['b0']
    for e in range(2):
        W = pp['wenc'][e]
        bqkv = pp['bqkv'][e]
        vec = pp['vec'][e]
        qkv = mm(h, W[:, 0:3 * FEATURE]) + bqkv
        q = qkv[:, 0:FEATURE].reshape(B, N, NUM_HEADS, HEAD_DIM)
        k = qkv[:, FEATURE:2 * FEATURE].reshape(B, N, NUM_HEADS, HEAD_DIM)
        v = qkv[:, 2 * FEATURE:3 * FEATURE].reshape(B, N, NUM_HEADS, HEAD_DIM)
        logits = jnp.einsum('bihd,bjhd->bhij', q, k)   # scale already folded
        p = jax.nn.softmax(logits, axis=-1)
        ctx = jnp.einsum('bhij,bjhd->bihd', p, v).reshape(B * N, FEATURE)
        attn = mm(ctx, W[:, 3 * FEATURE:4 * FEATURE]) + vec[0:1]
        h0 = _layernorm(h + attn, vec[3:4], vec[4:5])
        f = _gelu(mm(h0, W[:, 4 * FEATURE:5 * FEATURE]) + vec[1:2])
        f = mm(f, W[:, 5 * FEATURE:6 * FEATURE]) + vec[2:3]
        h = _layernorm(h0 + f, vec[5:6], vec[6:7])
    out = mm(h.reshape(B, N * FEATURE), pp['w_head']) + pp['b_head']
    return out.reshape(B, OUTPUT_DIM, OUTPUT_SIZE)


if __name__ == "__main__":
    key = jax.random.PRNGKey(0)
    pkey, xkey = jax.random.split(key)
    params = pack_params(init_params(pkey))

    x = jax.random.normal(xkey, (2, INPUT_DIM, INPUT_SIZE), jnp.float32)
    out = jax.block_until_ready(itransformer_forward(x, params))
    assert out.shape == (2, OUTPUT_DIM, OUTPUT_SIZE), out.shape
    assert bool(jnp.all(jnp.isfinite(out)))

    ref = _reference_forward(x, params)
    assert bool(jnp.allclose(out, ref, rtol=2e-2, atol=5e-3)), (
        float(jnp.max(jnp.abs(out - ref))))

    # Exercise the multi-step grid + batch-padding path as well.
    x2 = jax.random.normal(jax.random.PRNGKey(1), (20, INPUT_DIM, INPUT_SIZE),
                           jnp.float32)
    out2 = jax.block_until_ready(itransformer_forward(x2, params))
    assert out2.shape == (20, OUTPUT_DIM, OUTPUT_SIZE)
    assert bool(jnp.all(jnp.isfinite(out2)))

    print("KERNEL_OK")
</pallas_src>

<mosaic_0001>
module attributes {stable_mosaic.version = 11 : i64} {
  func.func @itransformer_kernel(%arg0: i32, %arg1: memref<8x16xf32, #tpu.memory_space<vmem>>, %arg2: memref<16x128xbf16, #tpu.memory_space<vmem>>, %arg3: memref<1x128xf32, #tpu.memory_space<vmem>>, %arg4: memref<2x128x768xbf16, #tpu.memory_space<vmem>>, %arg5: memref<2x1x384xf32, #tpu.memory_space<vmem>>, %arg6: memref<2x8x128xf32, #tpu.memory_space<vmem>>, %arg7: memref<128x128xf32, #tpu.memory_space<vmem>>, %arg8: memref<512x16xbf16, #tpu.memory_space<vmem>>, %arg9: memref<1x16xf32, #tpu.memory_space<vmem>>, %arg10: memref<2x16xf32, #tpu.memory_space<vmem>>) attributes {dimension_semantics = [#tpu.dimension_semantics<parallel>], iteration_bounds = array<i64: 1>, scalar_prefetch = 0 : i64, scratch_operands = 0 : i64, tpu.core_type = #tpu.core_type<tc>, window_params = [{transform_indices = @transform_0, window_bounds = array<i64: 8, 16>}, {pipeline_mode = #tpu.pipeline_mode<synchronous>, transform_indices = @transform_1, window_bounds = array<i64: 16, 128>}, {pipeline_mode = #tpu.pipeline_mode<synchronous>, transform_indices = @transform_2, window_bounds = array<i64: 1, 128>}, {pipeline_mode = #tpu.pipeline_mode<synchronous>, transform_indices = @transform_3, window_bounds = array<i64: 2, 128, 768>}, {pipeline_mode = #tpu.pipeline_mode<synchronous>, transform_indices = @transform_4, window_bounds = array<i64: 2, 1, 384>}, {pipeline_mode = #tpu.pipeline_mode<synchronous>, transform_indices = @transform_5, window_bounds = array<i64: 2, 8, 128>}, {pipeline_mode = #tpu.pipeline_mode<synchronous>, transform_indices = @transform_6, window_bounds = array<i64: 128, 128>}, {pipeline_mode = #tpu.pipeline_mode<synchronous>, transform_indices = @transform_7, window_bounds = array<i64: 512, 16>}, {pipeline_mode = #tpu.pipeline_mode<synchronous>, transform_indices = @transform_8, window_bounds = array<i64: 1, 16>}, {transform_indices = @transform_9, window_bounds = array<i64: 2, 16>}]} {
    %c0 = arith.constant 0 : index
    %c0_0 = arith.constant 0 : index
    %0 = vector.load %arg1[%c0, %c0_0] : memref<8x16xf32, #tpu.memory_space<vmem>>, vector<8x16xf32>
    %1 = arith.truncf %0 : vector<8x16xf32> to vector<8x16xbf16>
    %c0_1 = arith.constant 0 : index
    %c0_2 = arith.constant 0 : index
    %2 = vector.load %arg2[%c0_1, %c0_2] : memref<16x128xbf16, #tpu.memory_space<vmem>>, vector<16x128xbf16>
    %cst = arith.constant dense<0.000000e+00> : vector<8x128xf32>
    %3 = tpu.matmul %1, %2, %cst {dimension_numbers = #tpu.dot_dimension_numbers<[1], [0], [0], [1], [0, 0, 1, 1], [], []>} : vector<8x16xbf16>, vector<16x128xbf16>, vector<8x128xf32> -> vector<8x128xf32>
    %c0_3 = arith.constant 0 : index
    %c0_4 = arith.constant 0 : index
    %4 = vector.load %arg3[%c0_3, %c0_4] : memref<1x128xf32, #tpu.memory_space<vmem>>, vector<1x128xf32>
    %5 = vector.broadcast %4 : vector<1x128xf32> to vector<8x128xf32>
    %6 = arith.addf %3, %5 : vector<8x128xf32>
    %c0_5 = arith.constant 0 : index
    %c0_6 = arith.constant 0 : index
    %7 = vector.load %arg7[%c0_5, %c0_6] : memref<128x128xf32, #tpu.memory_space<vmem>>, vector<128x128xf32>
    %c0_7 = arith.constant 0 : index
    %c0_8 = arith.constant 0 : index
    %c0_9 = arith.constant 0 : index
    %8 = vector.load %arg4[%c0_7, %c0_8, %c0_9] : memref<2x128x768xbf16, #tpu.memory_space<vmem>>, vector<1x128x384xbf16>
    %9 = vector.shape_cast %8 : vector<1x128x384xbf16> to vector<128x384xbf16>
    %c0_10 = arith.constant 0 : index
    %c0_11 = arith.constant 0 : index
    %c384 = arith.constant 384 : index
    %10 = vector.load %arg4[%c0_10, %c0_11, %c384] : memref<2x128x768xbf16, #tpu.memory_space<vmem>>, vector<1x128x128xbf16>
    %11 = vector.shape_cast %10 : vector<1x128x128xbf16> to vector<128x128xbf16>
    %c0_12 = arith.constant 0 : index
    %c0_13 = arith.constant 0 : index
    %c512 = arith.constant 512 : index
    %12 = vector.load %arg4[%c0_12, %c0_13, %c512] : memref<2x128x768xbf16, #tpu.memory_space<vmem>>, vector<1x128x128xbf16>
    %13 = vector.shape_cast %12 : vector<1x128x128xbf16> to vector<128x128xbf16>
    %c0_14 = arith.constant 0 : index
    %c0_15 = arith.constant 0 : index
    %c640 = arith.constant 640 : index
    %14 = vector.load %arg4[%c0_14, %c0_15, %c640] : memref<2x128x768xbf16, #tpu.memory_space<vmem>>, vector<1x128x128xbf16>
    %15 = vector.shape_cast %14 : vector<1x128x128xbf16> to vector<128x128xbf16>
    %c0_16 = arith.constant 0 : index
    %c0_17 = arith.constant 0 : index
    %c0_18 = arith.constant 0 : index
    %16 = vector.load %arg5[%c0_16, %c0_17, %c0_18] : memref<2x1x384xf32, #tpu.memory_space<vmem>>, vector<1x1x384xf32>
    %17 = vector.shape_cast %16 : vector<1x1x384xf32> to vector<1x384xf32>
    %c0_19 = arith.constant 0 : index
    %c0_20 = arith.constant 0 : index
    %c0_21 = arith.constant 0 : index
    %18 = vector.load %arg6[%c0_19, %c0_20, %c0_21] : memref<2x8x128xf32, #tpu.memory_space<vmem>>, vector<1x1x128xf32>
    %19 = vector.shape_cast %18 : vector<1x1x128xf32> to vector<1x128xf32>
    %c0_22 = arith.constant 0 : index
    %c1 = arith.constant 1 : index
    %c0_23 = arith.constant 0 : index
    %20 = vector.load %arg6[%c0_22, %c1, %c0_23] : memref<2x8x128xf32, #tpu.memory_space<vmem>>, vector<1x1x128xf32>
    %21 = vector.shape_cast %20 : vector<1x1x128xf32> to vector<1x128xf32>
    %c0_24 = arith.constant 0 : index
    %c2 = arith.constant 2 : index
    %c0_25 = arith.constant 0 : index
    %22 = vector.load %arg6[%c0_24, %c2, %c0_25] : memref<2x8x128xf32, #tpu.memory_space<vmem>>, vector<1x1x128xf32>
    %23 = vector.shape_cast %22 : vector<1x1x128xf32> to vector<1x128xf32>
    %c0_26 = arith.constant 0 : index
    %c3 = arith.constant 3 : index
    %c0_27 = arith.constant 0 : index
    %24 = vector.load %arg6[%c0_26, %c3, %c0_27] : memref<2x8x128xf32, #tpu.memory_space<vmem>>, vector<1x1x128xf32>
    %25 = vector.shape_cast %24 : vector<1x1x128xf32> to vector<1x128xf32>
    %c0_28 = arith.constant 0 : index
    %c4 = arith.constant 4 : index
    %c0_29 = arith.constant 0 : index
    %26 = vector.load %arg6[%c0_28, %c4, %c0_29] : memref<2x8x128xf32, #tpu.memory_space<vmem>>, vector<1x1x128xf32>
    %27 = vector.shape_cast %26 : vector<1x1x128xf32> to vector<1x128xf32>
    %c0_30 = arith.constant 0 : index
    %c5 = arith.constant 5 : index
    %c0_31 = arith.constant 0 : index
    %28 = vector.load %arg6[%c0_30, %c5, %c0_31] : memref<2x8x128xf32, #tpu.memory_space<vmem>>, vector<1x1x128xf32>
    %29 = vector.shape_cast %28 : vector<1x1x128xf32> to vector<1x128xf32>
    %c0_32 = arith.constant 0 : index
    %c6 = arith.constant 6 : index
    %c0_33 = arith.constant 0 : index
    %30 = vector.load %arg6[%c0_32, %c6, %c0_33] : memref<2x8x128xf32, #tpu.memory_space<vmem>>, vector<1x1x128xf32>
    %31 = vector.shape_cast %30 : vector<1x1x128xf32> to vector<1x128xf32>
    %32 = arith.truncf %6 : vector<8x128xf32> to vector<8x128xbf16>
    %cst_34 = arith.constant dense<0.000000e+00> : vector<8x384xf32>
    %33 = tpu.matmul %32, %9, %cst_34 {dimension_numbers = #tpu.dot_dimension_numbers<[1], [0], [0], [1], [0, 0, 1, 1], [], []>} : vector<8x128xbf16>, vector<128x384xbf16>, vector<8x384xf32> -> vector<8x384xf32>
    %34 = vector.broadcast %17 : vector<1x384xf32> to vector<8x384xf32>
    %35 = arith.addf %33, %34 : vector<8x384xf32>
    %36 = vector.extract_strided_slice %35 {offsets = [0, 0], sizes = [8, 128], strides = [1, 1]} : vector<8x384xf32> to vector<8x128xf32>
    %37 = vector.shape_cast %36 : vector<8x128xf32> to vector<2x4x128xf32>
    %38 = vector.extract_strided_slice %35 {offsets = [0, 128], sizes = [8, 128], strides = [1, 1]} : vector<8x384xf32> to vector<8x128xf32>
    %39 = vector.shape_cast %38 : vector<8x128xf32> to vector<2x4x128xf32>
    %40 = vector.extract_strided_slice %35 {offsets = [0, 256], sizes = [8, 128], strides = [1, 1]} : vector<8x384xf32> to vector<8x128xf32>
    %41 = vector.shape_cast %40 : vector<8x128xf32> to vector<2x4x128xf32>
    %42 = vector.shape_cast %37 : vector<2x4x128xf32> to vector<2x4x1x128xf32>
    %43 = vector.shape_cast %39 : vector<2x4x128xf32> to vector<2x1x4x128xf32>
    %44 = vector.broadcast %42 : vector<2x4x1x128xf32> to vector<2x4x4x128xf32>
    %45 = vector.broadcast %43 : vector<2x1x4x128xf32> to vector<2x4x4x128xf32>
    %46 = arith.mulf %44, %45 : vector<2x4x4x128xf32>
    %47 = vector.shape_cast %46 : vector<2x4x4x128xf32> to vector<32x128xf32>
    %cst_35 = arith.constant dense<0.000000e+00> : vector<32x128xf32>
    %48 = tpu.matmul %47, %7, %cst_35 {dimension_numbers = #tpu.dot_dimension_numbers<[1], [0], [0], [1], [0, 0, 1, 1], [], []>} : vector<32x128xf32>, vector<128x128xf32>, vector<32x128xf32> -> vector<32x128xf32>
    %49 = vector.shape_cast %48 : vector<32x128xf32> to vector<2x4x4x128xf32>
    %cst_36 = arith.constant dense<0xFF800000> : vector<2x4x128xf32>
    %50 = vector.multi_reduction <maximumf>, %49, %cst_36 [2] : vector<2x4x4x128xf32> to vector<2x4x128xf32>
    %51 = vector.shape_cast %50 : vector<2x4x128xf32> to vector<2x4x1x128xf32>
    %52 = vector.broadcast %51 : vector<2x4x1x128xf32> to vector<2x4x4x128xf32>
    %53 = arith.subf %49, %52 : vector<2x4x4x128xf32>
    %54 = math.exp %53 : vector<2x4x4x128xf32>
    %cst_37 = arith.constant dense<0.000000e+00> : vector<2x4x128xf32>
    %55 = vector.multi_reduction <add>, %54, %cst_37 [2] : vector<2x4x4x128xf32> to vector<2x4x128xf32>
    %56 = vector.shape_cast %55 : vector<2x4x128xf32> to vector<2x4x1x128xf32>
    %57 = vector.broadcast %56 : vector<2x4x1x128xf32> to vector<2x4x4x128xf32>
    %58 = arith.divf %54, %57 : vector<2x4x4x128xf32>
    %59 = vector.shape_cast %41 : vector<2x4x128xf32> to vector<2x1x4x128xf32>
    %60 = vector.broadcast %59 : vector<2x1x4x128xf32> to vector<2x4x4x128xf32>
    %61 = arith.mulf %58, %60 : vector<2x4x4x128xf32>
    %cst_38 = arith.constant dense<0.000000e+00> : vector<2x4x128xf32>
    %62 = vector.multi_reduction <add>, %61, %cst_38 [2] : vector<2x4x4x128xf32> to vector<2x4x128xf32>
    %63 = vector.shape_cast %62 : vector<2x4x128xf32> to vector<8x128xf32>
    %64 = arith.truncf %63 : vector<8x128xf32> to vector<8x128xbf16>
    %cst_39 = arith.constant dense<0.000000e+00> : vector<8x128xf32>
    %65 = tpu.matmul %64, %11, %cst_39 {dimension_numbers = #tpu.dot_dimension_numbers<[1], [0], [0], [1], [0, 0, 1, 1], [], []>} : vector<8x128xbf16>, vector<128x128xbf16>, vector<8x128xf32> -> vector<8x128xf32>
    %66 = vector.broadcast %19 : vector<1x128xf32> to vector<8x128xf32>
    %67 = arith.addf %65, %66 : vector<8x128xf32>
    %68 = arith.addf %6, %67 : vector<8x128xf32>
    %cst_40 = arith.constant dense<0.000000e+00> : vector<8xf32>
    %69 = vector.multi_reduction <add>, %68, %cst_40 [1] : vector<8x128xf32> to vector<8xf32>
    %70 = vector.shape_cast %69 : vector<8xf32> to vector<8x1xf32>
    %cst_41 = arith.constant 1.280000e+02 : f32
    %71 = vector.broadcast %cst_41 : f32 to vector<8x1xf32>
    %72 = arith.divf %70, %71 : vector<8x1xf32>
    %73 = vector.broadcast %72 : vector<8x1xf32> to vector<8x128xf32>
    %74 = arith.subf %68, %73 : vector<8x128xf32>
    %75 = arith.mulf %74, %74 : vector<8x128xf32>
    %cst_42 = arith.constant dense<0.000000e+00> : vector<8xf32>
    %76 = vector.multi_reduction <add>, %75, %cst_42 [1] : vector<8x128xf32> to vector<8xf32>
    %77 = vector.shape_cast %76 : vector<8xf32> to vector<8x1xf32>
    %cst_43 = arith.constant 1.280000e+02 : f32
    %78 = vector.broadcast %cst_43 : f32 to vector<8x1xf32>
    %79 = arith.divf %77, %78 : vector<8x1xf32>
    %80 = vector.broadcast %72 : vector<8x1xf32> to vector<8x128xf32>
    %81 = arith.subf %68, %80 : vector<8x128xf32>
    %cst_44 = arith.constant 9.99999974E-6 : f32
    %82 = vector.broadcast %cst_44 : f32 to vector<8x1xf32>
    %83 = arith.addf %79, %82 : vector<8x1xf32>
    %84 = math.rsqrt %83 : vector<8x1xf32>
    %85 = vector.broadcast %84 : vector<8x1xf32> to vector<8x128xf32>
    %86 = arith.mulf %81, %85 : vector<8x128xf32>
    %87 = vector.broadcast %25 : vector<1x128xf32> to vector<8x128xf32>
    %88 = arith.mulf %86, %87 : vector<8x128xf32>
    %89 = vector.broadcast %27 : vector<1x128xf32> to vector<8x128xf32>
    %90 = arith.addf %88, %89 : vector<8x128xf32>
    %91 = arith.truncf %90 : vector<8x128xf32> to vector<8x128xbf16>
    %cst_45 = arith.constant dense<0.000000e+00> : vector<8x128xf32>
    %92 = tpu.matmul %91, %13, %cst_45 {dimension_numbers = #tpu.dot_dimension_numbers<[1], [0], [0], [1], [0, 0, 1, 1], [], []>} : vector<8x128xbf16>, vector<128x128xbf16>, vector<8x128xf32> -> vector<8x128xf32>
    %93 = vector.broadcast %21 : vector<1x128xf32> to vector<8x128xf32>
    %94 = arith.addf %92, %93 : vector<8x128xf32>
    %cst_46 = arith.constant 5.000000e-01 : f32
    %95 = vector.broadcast %cst_46 : f32 to vector<8x128xf32>
    %96 = arith.mulf %95, %94 : vector<8x128xf32>
    %cst_47 = arith.constant 4.471500e-02 : f32
    %97 = vector.broadcast %cst_47 : f32 to vector<8x128xf32>
    %98 = arith.mulf %97, %94 : vector<8x128xf32>
    %99 = arith.mulf %98, %94 : vector<8x128xf32>
    %100 = arith.mulf %99, %94 : vector<8x128xf32>
    %101 = arith.addf %94, %100 : vector<8x128xf32>
    %cst_48 = arith.constant 0.797884583 : f32
    %102 = vector.broadcast %cst_48 : f32 to vector<8x128xf32>
    %103 = arith.mulf %102, %101 : vector<8x128xf32>
    %104 = math.tanh %103 : vector<8x128xf32>
    %cst_49 = arith.constant 1.000000e+00 : f32
    %105 = vector.broadcast %cst_49 : f32 to vector<8x128xf32>
    %106 = arith.addf %105, %104 : vector<8x128xf32>
    %107 = arith.mulf %96, %106 : vector<8x128xf32>
    %108 = arith.truncf %107 : vector<8x128xf32> to vector<8x128xbf16>
    %cst_50 = arith.constant dense<0.000000e+00> : vector<8x128xf32>
    %109 = tpu.matmul %108, %15, %cst_50 {dimension_numbers = #tpu.dot_dimension_numbers<[1], [0], [0], [1], [0, 0, 1, 1], [], []>} : vector<8x128xbf16>, vector<128x128xbf16>, vector<8x128xf32> -> vector<8x128xf32>
    %110 = vector.broadcast %23 : vector<1x128xf32> to vector<8x128xf32>
    %111 = arith.addf %109, %110 : vector<8x128xf32>
    %112 = arith.addf %90, %111 : vector<8x128xf32>
    %cst_51 = arith.constant dense<0.000000e+00> : vector<8xf32>
    %113 = vector.multi_reduction <add>, %112, %cst_51 [1] : vector<8x128xf32> to vector<8xf32>
    %114 = vector.shape_cast %113 : vector<8xf32> to vector<8x1xf32>
    %cst_52 = arith.constant 1.280000e+02 : f32
    %115 = vector.broadcast %cst_52 : f32 to vector<8x1xf32>
    %116 = arith.divf %114, %115 : vector<8x1xf32>
    %117 = vector.broadcast %116 : vector<8x1xf32> to vector<8x128xf32>
    %118 = arith.subf %112, %117 : vector<8x128xf32>
    %119 = arith.mulf %118, %118 : vector<8x128xf32>
    %cst_53 = arith.constant dense<0.000000e+00> : vector<8xf32>
    %120 = vector.multi_reduction <add>, %119, %cst_53 [1] : vector<8x128xf32> to vector<8xf32>
    %121 = vector.shape_cast %120 : vector<8xf32> to vector<8x1xf32>
    %cst_54 = arith.constant 1.280000e+02 : f32
    %122 = vector.broadcast %cst_54 : f32 to vector<8x1xf32>
    %123 = arith.divf %121, %122 : vector<8x1xf32>
    %124 = vector.broadcast %116 : vector<8x1xf32> to vector<8x128xf32>
    %125 = arith.subf %112, %124 : vector<8x128xf32>
    %cst_55 = arith.constant 9.99999974E-6 : f32
    %126 = vector.broadcast %cst_55 : f32 to vector<8x1xf32>
    %127 = arith.addf %123, %126 : vector<8x1xf32>
    %128 = math.rsqrt %127 : vector<8x1xf32>
    %129 = vector.broadcast %128 : vector<8x1xf32> to vector<8x128xf32>
    %130 = arith.mulf %125, %129 : vector<8x128xf32>
    %131 = vector.broadcast %29 : vector<1x128xf32> to vector<8x128xf32>
    %132 = arith.mulf %130, %131 : vector<8x128xf32>
    %133 = vector.broadcast %31 : vector<1x128xf32> to vector<8x128xf32>
    %134 = arith.addf %132, %133 : vector<8x128xf32>
    %c1_56 = arith.constant 1 : index
    %c0_57 = arith.constant 0 : index
    %c0_58 = arith.constant 0 : index
    %135 = vector.load %arg4[%c1_56, %c0_57, %c0_58] : memref<2x128x768xbf16, #tpu.memory_space<vmem>>, vector<1x128x384xbf16>
    %136 = vector.shape_cast %135 : vector<1x128x384xbf16> to vector<128x384xbf16>
    %c1_59 = arith.constant 1 : index
    %c0_60 = arith.constant 0 : index
    %c384_61 = arith.constant 384 : index
    %137 = vector.load %arg4[%c1_59, %c0_60, %c384_61] : memref<2x128x768xbf16, #tpu.memory_space<vmem>>, vector<1x128x128xbf16>
    %138 = vector.shape_cast %137 : vector<1x128x128xbf16> to vector<128x128xbf16>
    %c1_62 = arith.constant 1 : index
    %c0_63 = arith.constant 0 : index
    %c512_64 = arith.constant 512 : index
    %139 = vector.load %arg4[%c1_62, %c0_63, %c512_64] : memref<2x128x768xbf16, #tpu.memory_space<vmem>>, vector<1x128x128xbf16>
    %140 = vector.shape_cast %139 : vector<1x128x128xbf16> to vector<128x128xbf16>
    %c1_65 = arith.constant 1 : index
    %c0_66 = arith.constant 0 : index
    %c640_67 = arith.constant 640 : index
    %141 = vector.load %arg4[%c1_65, %c0_66, %c640_67] : memref<2x128x768xbf16, #tpu.memory_space<vmem>>, vector<1x128x128xbf16>
    %142 = vector.shape_cast %141 : vector<1x128x128xbf16> to vector<128x128xbf16>
    %c1_68 = arith.constant 1 : index
    %c0_69 = arith.constant 0 : index
    %c0_70 = arith.constant 0 : index
    %143 = vector.load %arg5[%c1_68, %c0_69, %c0_70] : memref<2x1x384xf32, #tpu.memory_space<vmem>>, vector<1x1x384xf32>
    %144 = vector.shape_cast %143 : vector<1x1x384xf32> to vector<1x384xf32>
    %c1_71 = arith.constant 1 : index
    %c0_72 = arith.constant 0 : index
    %c0_73 = arith.constant 0 : index
    %145 = vector.load %arg6[%c1_71, %c0_72, %c0_73] : memref<2x8x128xf32, #tpu.memory_space<vmem>>, vector<1x1x128xf32>
    %146 = vector.shape_cast %145 : vector<1x1x128xf32> to vector<1x128xf32>
    %c1_74 = arith.constant 1 : index
    %c1_75 = arith.constant 1 : index
    %c0_76 = arith.constant 0 : index
    %147 = vector.load %arg6[%c1_74, %c1_75, %c0_76] : memref<2x8x128xf32, #tpu.memory_space<vmem>>, vector<1x1x128xf32>
    %148 = vector.shape_cast %147 : vector<1x1x128xf32> to vector<1x128xf32>
    %c1_77 = arith.constant 1 : index
    %c2_78 = arith.constant 2 : index
    %c0_79 = arith.constant 0 : index
    %149 = vector.load %arg6[%c1_77, %c2_78, %c0_79] : memref<2x8x128xf32, #tpu.memory_space<vmem>>, vector<1x1x128xf32>
    %150 = vector.shape_cast %149 : vector<1x1x128xf32> to vector<1x128xf32>
    %c1_80 = arith.constant 1 : index
    %c3_81 = arith.constant 3 : index
    %c0_82 = arith.constant 0 : index
    %151 = vector.load %arg6[%c1_80, %c3_81, %c0_82] : memref<2x8x128xf32, #tpu.memory_space<vmem>>, vector<1x1x128xf32>
    %152 = vector.shape_cast %151 : vector<1x1x128xf32> to vector<1x128xf32>
    %c1_83 = arith.constant 1 : index
    %c4_84 = arith.constant 4 : index
    %c0_85 = arith.constant 0 : index
    %153 = vector.load %arg6[%c1_83, %c4_84, %c0_85] : memref<2x8x128xf32, #tpu.memory_space<vmem>>, vector<1x1x128xf32>
    %154 = vector.shape_cast %153 : vector<1x1x128xf32> to vector<1x128xf32>
    %c1_86 = arith.constant 1 : index
    %c5_87 = arith.constant 5 : index
    %c0_88 = arith.constant 0 : index
    %155 = vector.load %arg6[%c1_86, %c5_87, %c0_88] : memref<2x8x128xf32, #tpu.memory_space<vmem>>, vector<1x1x128xf32>
    %156 = vector.shape_cast %155 : vector<1x1x128xf32> to vector<1x128xf32>
    %c1_89 = arith.constant 1 : index
    %c6_90 = arith.constant 6 : index
    %c0_91 = arith.constant 0 : index
    %157 = vector.load %arg6[%c1_89, %c6_90, %c0_91] : memref<2x8x128xf32, #tpu.memory_space<vmem>>, vector<1x1x128xf32>
    %158 = vector.shape_cast %157 : vector<1x1x128xf32> to vector<1x128xf32>
    %159 = arith.truncf %134 : vector<8x128xf32> to vector<8x128xbf16>
    %cst_92 = arith.constant dense<0.000000e+00> : vector<8x384xf32>
    %160 = tpu.matmul %159, %136, %cst_92 {dimension_numbers = #tpu.dot_dimension_numbers<[1], [0], [0], [1], [0, 0, 1, 1], [], []>} : vector<8x128xbf16>, vector<128x384xbf16>, vector<8x384xf32> -> vector<8x384xf32>
    %161 = vector.broadcast %144 : vector<1x384xf32> to vector<8x384xf32>
    %162 = arith.addf %160, %161 : vector<8x384xf32>
    %163 = vector.extract_strided_slice %162 {offsets = [0, 0], sizes = [8, 128], strides = [1, 1]} : vector<8x384xf32> to vector<8x128xf32>
    %164 = vector.shape_cast %163 : vector<8x128xf32> to vector<2x4x128xf32>
    %165 = vector.extract_strided_slice %162 {offsets = [0, 128], sizes = [8, 128], strides = [1, 1]} : vector<8x384xf32> to vector<8x128xf32>
    %166 = vector.shape_cast %165 : vector<8x128xf32> to vector<2x4x128xf32>
    %167 = vector.extract_strided_slice %162 {offsets = [0, 256], sizes = [8, 128], strides = [1, 1]} : vector<8x384xf32> to vector<8x128xf32>
    %168 = vector.shape_cast %167 : vector<8x128xf32> to vector<2x4x128xf32>
    %169 = vector.shape_cast %164 : vector<2x4x128xf32> to vector<2x4x1x128xf32>
    %170 = vector.shape_cast %166 : vector<2x4x128xf32> to vector<2x1x4x128xf32>
    %171 = vector.broadcast %169 : vector<2x4x1x128xf32> to vector<2x4x4x128xf32>
    %172 = vector.broadcast %170 : vector<2x1x4x128xf32> to vector<2x4x4x128xf32>
    %173 = arith.mulf %171, %172 : vector<2x4x4x128xf32>
    %174 = vector.shape_cast %173 : vector<2x4x4x128xf32> to vector<32x128xf32>
    %cst_93 = arith.constant dense<0.000000e+00> : vector<32x128xf32>
    %175 = tpu.matmul %174, %7, %cst_93 {dimension_numbers = #tpu.dot_dimension_numbers<[1], [0], [0], [1], [0, 0, 1, 1], [], []>} : vector<32x128xf32>, vector<128x128xf32>, vector<32x128xf32> -> vector<32x128xf32>
    %176 = vector.shape_cast %175 : vector<32x128xf32> to vector<2x4x4x128xf32>
    %cst_94 = arith.constant dense<0xFF800000> : vector<2x4x128xf32>
    %177 = vector.multi_reduction <maximumf>, %176, %cst_94 [2] : vector<2x4x4x128xf32> to vector<2x4x128xf32>
    %178 = vector.shape_cast %177 : vector<2x4x128xf32> to vector<2x4x1x128xf32>
    %179 = vector.broadcast %178 : vector<2x4x1x128xf32> to vector<2x4x4x128xf32>
    %180 = arith.subf %176, %179 : vector<2x4x4x128xf32>
    %181 = math.exp %180 : vector<2x4x4x128xf32>
    %cst_95 = arith.constant dense<0.000000e+00> : vector<2x4x128xf32>
    %182 = vector.multi_reduction <add>, %181, %cst_95 [2] : vector<2x4x4x128xf32> to vector<2x4x128xf32>
    %183 = vector.shape_cast %182 : vector<2x4x128xf32> to vector<2x4x1x128xf32>
    %184 = vector.broadcast %183 : vector<2x4x1x128xf32> to vector<2x4x4x128xf32>
    %185 = arith.divf %181, %184 : vector<2x4x4x128xf32>
    %186 = vector.shape_cast %168 : vector<2x4x128xf32> to vector<2x1x4x128xf32>
    %187 = vector.broadcast %186 : vector<2x1x4x128xf32> to vector<2x4x4x128xf32>
    %188 = arith.mulf %185, %187 : vector<2x4x4x128xf32>
    %cst_96 = arith.constant dense<0.000000e+00> : vector<2x4x128xf32>
    %189 = vector.multi_reduction <add>, %188, %cst_96 [2] : vector<2x4x4x128xf32> to vector<2x4x128xf32>
    %190 = vector.shape_cast %189 : vector<2x4x128xf32> to vector<8x128xf32>
    %191 = arith.truncf %190 : vector<8x128xf32> to vector<8x128xbf16>
    %cst_97 = arith.constant dense<0.000000e+00> : vector<8x128xf32>
    %192 = tpu.matmul %191, %138, %cst_97 {dimension_numbers = #tpu.dot_dimension_numbers<[1], [0], [0], [1], [0, 0, 1, 1], [], []>} : vector<8x128xbf16>, vector<128x128xbf16>, vector<8x128xf32> -> vector<8x128xf32>
    %193 = vector.broadcast %146 : vector<1x128xf32> to vector<8x128xf32>
    %194 = arith.addf %192, %193 : vector<8x128xf32>
    %195 = arith.addf %134, %194 : vector<8x128xf32>
    %cst_98 = arith.constant dense<0.000000e+00> : vector<8xf32>
    %196 = vector.multi_reduction <add>, %195, %cst_98 [1] : vector<8x128xf32> to vector<8xf32>
    %197 = vector.shape_cast %196 : vector<8xf32> to vector<8x1xf32>
    %cst_99 = arith.constant 1.280000e+02 : f32
    %198 = vector.broadcast %cst_99 : f32 to vector<8x1xf32>
    %199 = arith.divf %197, %198 : vector<8x1xf32>
    %200 = vector.broadcast %199 : vector<8x1xf32> to vector<8x128xf32>
    %201 = arith.subf %195, %200 : vector<8x128xf32>
    %202 = arith.mulf %201, %201 : vector<8x128xf32>
    %cst_100 = arith.constant dense<0.000000e+00> : vector<8xf32>
    %203 = vector.multi_reduction <add>, %202, %cst_100 [1] : vector<8x128xf32> to vector<8xf32>
    %204 = vector.shape_cast %203 : vector<8xf32> to vector<8x1xf32>
    %cst_101 = arith.constant 1.280000e+02 : f32
    %205 = vector.broadcast %cst_101 : f32 to vector<8x1xf32>
    %206 = arith.divf %204, %205 : vector<8x1xf32>
    %207 = vector.broadcast %199 : vector<8x1xf32> to vector<8x128xf32>
    %208 = arith.subf %195, %207 : vector<8x128xf32>
    %cst_102 = arith.constant 9.99999974E-6 : f32
    %209 = vector.broadcast %cst_102 : f32 to vector<8x1xf32>
    %210 = arith.addf %206, %209 : vector<8x1xf32>
    %211 = math.rsqrt %210 : vector<8x1xf32>
    %212 = vector.broadcast %211 : vector<8x1xf32> to vector<8x128xf32>
    %213 = arith.mulf %208, %212 : vector<8x128xf32>
    %214 = vector.broadcast %152 : vector<1x128xf32> to vector<8x128xf32>
    %215 = arith.mulf %213, %214 : vector<8x128xf32>
    %216 = vector.broadcast %154 : vector<1x128xf32> to vector<8x128xf32>
    %217 = arith.addf %215, %216 : vector<8x128xf32>
    %218 = arith.truncf %217 : vector<8x128xf32> to vector<8x128xbf16>
    %cst_103 = arith.constant dense<0.000000e+00> : vector<8x128xf32>
    %219 = tpu.matmul %218, %140, %cst_103 {dimension_numbers = #tpu.dot_dimension_numbers<[1], [0], [0], [1], [0, 0, 1, 1], [], []>} : vector<8x128xbf16>, vector<128x128xbf16>, vector<8x128xf32> -> vector<8x128xf32>
    %220 = vector.broadcast %148 : vector<1x128xf32> to vector<8x128xf32>
    %221 = arith.addf %219, %220 : vector<8x128xf32>
    %cst_104 = arith.constant 5.000000e-01 : f32
    %222 = vector.broadcast %cst_104 : f32 to vector<8x128xf32>
    %223 = arith.mulf %222, %221 : vector<8x128xf32>
    %cst_105 = arith.constant 4.471500e-02 : f32
    %224 = vector.broadcast %cst_105 : f32 to vector<8x128xf32>
    %225 = arith.mulf %224, %221 : vector<8x128xf32>
    %226 = arith.mulf %225, %221 : vector<8x128xf32>
    %227 = arith.mulf %226, %221 : vector<8x128xf32>
    %228 = arith.addf %221, %227 : vector<8x128xf32>
    %cst_106 = arith.constant 0.797884583 : f32
    %229 = vector.broadcast %cst_106 : f32 to vector<8x128xf32>
    %230 = arith.mulf %229, %228 : vector<8x128xf32>
    %231 = math.tanh %230 : vector<8x128xf32>
    %cst_107 = arith.constant 1.000000e+00 : f32
    %232 = vector.broadcast %cst_107 : f32 to vector<8x128xf32>
    %233 = arith.addf %232, %231 : vector<8x128xf32>
    %234 = arith.mulf %223, %233 : vector<8x128xf32>
    %235 = arith.truncf %234 : vector<8x128xf32> to vector<8x128xbf16>
    %cst_108 = arith.constant dense<0.000000e+00> : vector<8x128xf32>
    %236 = tpu.matmul %235, %142, %cst_108 {dimension_numbers = #tpu.dot_dimension_numbers<[1], [0], [0], [1], [0, 0, 1, 1], [], []>} : vector<8x128xbf16>, vector<128x128xbf16>, vector<8x128xf32> -> vector<8x128xf32>
    %237 = vector.broadcast %150 : vector<1x128xf32> to vector<8x128xf32>
    %238 = arith.addf %236, %237 : vector<8x128xf32>
    %239 = arith.addf %217, %238 : vector<8x128xf32>
    %cst_109 = arith.constant dense<0.000000e+00> : vector<8xf32>
    %240 = vector.multi_reduction <add>, %239, %cst_109 [1] : vector<8x128xf32> to vector<8xf32>
    %241 = vector.shape_cast %240 : vector<8xf32> to vector<8x1xf32>
    %cst_110 = arith.constant 1.280000e+02 : f32
    %242 = vector.broadcast %cst_110 : f32 to vector<8x1xf32>
    %243 = arith.divf %241, %242 : vector<8x1xf32>
    %244 = vector.broadcast %243 : vector<8x1xf32> to vector<8x128xf32>
    %245 = arith.subf %239, %244 : vector<8x128xf32>
    %246 = arith.mulf %245, %245 : vector<8x128xf32>
    %cst_111 = arith.constant dense<0.000000e+00> : vector<8xf32>
    %247 = vector.multi_reduction <add>, %246, %cst_111 [1] : vector<8x128xf32> to vector<8xf32>
    %248 = vector.shape_cast %247 : vector<8xf32> to vector<8x1xf32>
    %cst_112 = arith.constant 1.280000e+02 : f32
    %249 = vector.broadcast %cst_112 : f32 to vector<8x1xf32>
    %250 = arith.divf %248, %249 : vector<8x1xf32>
    %251 = vector.broadcast %243 : vector<8x1xf32> to vector<8x128xf32>
    %252 = arith.subf %239, %251 : vector<8x128xf32>
    %cst_113 = arith.constant 9.99999974E-6 : f32
    %253 = vector.broadcast %cst_113 : f32 to vector<8x1xf32>
    %254 = arith.addf %250, %253 : vector<8x1xf32>
    %255 = math.rsqrt %254 : vector<8x1xf32>
    %256 = vector.broadcast %255 : vector<8x1xf32> to vector<8x128xf32>
    %257 = arith.mulf %252, %256 : vector<8x128xf32>
    %258 = vector.broadcast %156 : vector<1x128xf32> to vector<8x128xf32>
    %259 = arith.mulf %257, %258 : vector<8x128xf32>
    %260 = vector.broadcast %158 : vector<1x128xf32> to vector<8x128xf32>
    %261 = arith.addf %259, %260 : vector<8x128xf32>
    %262 = vector.shape_cast %261 : vector<8x128xf32> to vector<2x512xf32>
    %263 = arith.truncf %262 : vector<2x512xf32> to vector<2x512xbf16>
    %c0_114 = arith.constant 0 : index
    %c0_115 = arith.constant 0 : index
    %264 = vector.load %arg8[%c0_114, %c0_115] : memref<512x16xbf16, #tpu.memory_space<vmem>>, vector<512x16xbf16>
    %cst_116 = arith.constant dense<0.000000e+00> : vector<2x16xf32>
    %265 = tpu.matmul %263, %264, %cst_116 {dimension_numbers = #tpu.dot_dimension_numbers<[1], [0], [0], [1], [0, 0, 1, 1], [], []>} : vector<2x512xbf16>, vector<512x16xbf16>, vector<2x16xf32> -> vector<2x16xf32>
    %c0_117 = arith.constant 0 : index
    %c0_118 = arith.constant 0 : index
    %266 = vector.load %arg9[%c0_117, %c0_118] : memref<1x16xf32, #tpu.memory_space<vmem>>, vector<1x16xf32>
    %267 = vector.broadcast %266 : vector<1x16xf32> to vector<2x16xf32>
    %268 = arith.addf %265, %267 : vector<2x16xf32>
    %c0_119 = arith.constant 0 : index
    %c0_120 = arith.constant 0 : index
    %269 = vector.load %arg10[%c0_119, %c0_120] : memref<2x16xf32, #tpu.memory_space<vmem>>, vector<2x16xf32>
    tpu.vector_store %arg10[%c0_119, %c0_120], %268 {strides = array<i32>} : memref<2x16xf32, #tpu.memory_space<vmem>>, vector<2x16xf32>,
    return
  }
  func.func @transform_0(%arg0: i32) -> (i32, i32) {
    %c0_i32 = arith.constant 0 : i32
    %c0_i32_0 = arith.constant 0 : i32
    return %arg0, %c0_i32 : i32, i32
  }
  func.func @transform_1(%arg0: i32) -> (i32, i32) {
    %c0_i32 = arith.constant 0 : i32
    %c0_i32_0 = arith.constant 0 : i32
    %c0_i32_1 = arith.constant 0 : i32
    return %c0_i32, %c0_i32_0 : i32, i32
  }
  func.func @transform_2(%arg0: i32) -> (i32, i32) {
    %c0_i32 = arith.constant 0 : i32
    %c0_i32_0 = arith.constant 0 : i32
    %c0_i32_1 = arith.constant 0 : i32
    return %c0_i32, %c0_i32_0 : i32, i32
  }
  func.func @transform_3(%arg0: i32) -> (i32, i32, i32) {
    %c0_i32 = arith.constant 0 : i32
    %c0_i32_0 = arith.constant 0 : i32
    %c0_i32_1 = arith.constant 0 : i32
    %c0_i32_2 = arith.constant 0 : i32
    return %c0_i32, %c0_i32_0, %c0_i32_1 : i32, i32, i32
  }
  func.func @transform_4(%arg0: i32) -> (i32, i32, i32) {
    %c0_i32 = arith.constant 0 : i32
    %c0_i32_0 = arith.constant 0 : i32
    %c0_i32_1 = arith.constant 0 : i32
    %c0_i32_2 = arith.constant 0 : i32
    return %c0_i32, %c0_i32_0, %c0_i32_1 : i32, i32, i32
  }
  func.func @transform_5(%arg0: i32) -> (i32, i32, i32) {
    %c0_i32 = arith.constant 0 : i32
    %c0_i32_0 = arith.constant 0 : i32
    %c0_i32_1 = arith.constant 0 : i32
    %c0_i32_2 = arith.constant 0 : i32
    return %c0_i32, %c0_i32_0, %c0_i32_1 : i32, i32, i32
  }
  func.func @transform_6(%arg0: i32) -> (i32, i32) {
    %c0_i32 = arith.constant 0 : i32
    %c0_i32_0 = arith.constant 0 : i32
    %c0_i32_1 = arith.constant 0 : i32
    return %c0_i32, %c0_i32_0 : i32, i32
  }
  func.func @transform_7(%arg0: i32) -> (i32, i32) {
    %c0_i32 = arith.constant 0 : i32
    %c0_i32_0 = arith.constant 0 : i32
    %c0_i32_1 = arith.constant 0 : i32
    return %c0_i32, %c0_i32_0 : i32, i32
  }
  func.func @transform_8(%arg0: i32) -> (i32, i32) {
    %c0_i32 = arith.constant 0 : i32
    %c0_i32_0 = arith.constant 0 : i32
    %c0_i32_1 = arith.constant 0 : i32
    return %c0_i32, %c0_i32_0 : i32, i32
  }
  func.func @transform_9(%arg0: i32) -> (i32, i32) {
    %c0_i32 = arith.constant 0 : i32
    %c0_i32_0 = arith.constant 0 : i32
    return %arg0, %c0_i32 : i32, i32
  }
}

</mosaic_0001>

<llo_original>
// kernel: itransformer_forward.1
$region0: #{itransformer_forward.1}
  #allocation0 [shape = 'u32[]', space=smem, size = 0x4, offset = 0x4, fixed_abs, tag = 'smem constant byte address 0x4 - core index']
  #allocation1 [shape = 'u32[144,128]{1,0:T(1,128)}', space=vmem, size = 0x12000, scoped, tag = 'internal scratch']
  %s0 = inlined_call_operand.vmem [shape: f32[8,16], index: 0, kind: input, shape index: {}]
  %s1 = inlined_call_operand.vmem [shape: bf16[16,128], index: 1, kind: input, shape index: {}]
  %s2 = inlined_call_operand.vmem [shape: f32[1,128], index: 2, kind: input, shape index: {}]
  %s3 = inlined_call_operand.hbm [shape: bf16[2,128,768], index: 3, kind: input, shape index: {}]
  %s4 = inlined_call_operand.vmem [shape: f32[2,1,384], index: 4, kind: input, shape index: {}]
  %s5 = inlined_call_operand.vmem [shape: f32[2,8,128], index: 5, kind: input, shape index: {}]
  %s6 = inlined_call_operand.vmem [shape: f32[128,128], index: 6, kind: input, shape index: {}]
  %s7 = inlined_call_operand.vmem [shape: bf16[512,16], index: 7, kind: input, shape index: {}]
  %s8 = inlined_call_operand.vmem [shape: f32[1,16], index: 8, kind: input, shape index: {}]
  %s9 = inlined_call_operand.vmem [shape: f32[2,16], index: 9, kind: output, shape index: {}]
  %s10 = sld [smem:[#allocation0]]
  $region50: #{itransformer_forward.1} parent=0
    _
  %s12 = ssub.s32 1, %s10
  %s13 = scalar_select 0, %s12, %s10
  $region1: #{itransformer_forward.1} parent=0
    #allocation2 [shape = 'u8[393216]{0}', space=vmem, size = 0x60000, scoped, tag = 'input window, operand 3, single buffered']
    #allocation3 [shape = 's32[1]{0}', space=sflag, size = 0x4, scoped, tag = 'scoped memory for itransformer_forward.1']
    %14 = vsyncpa [#allocation3], 0
    // Predicated region
    $region2: #{itransformer_forward.1} parent=1 // pred_check
      _
    $region3: #{itransformer_forward.1} parent=1 // pred_check_branch
      %16 = sbr.rel (0) target = $region5
    $region4: #{itransformer_forward.1} parent=1 // pred_region
      _
    $region5: #{itransformer_forward.1} parent=1 // pred_fallthru
      _
    // Predicated region
    $region6: #{itransformer_forward.1} parent=1 // pred_check
      _
    $region7: #{itransformer_forward.1} parent=1 // pred_check_branch
      %18 = sbr.rel (0) target = $region9
    $region8: #{itransformer_forward.1} parent=1 // pred_region
      _
    $region9: #{itransformer_forward.1} parent=1 // pred_fallthru
      _
    // Predicated region
    $region10: #{itransformer_forward.1} parent=1 // pred_check
      _
    $region11: #{itransformer_forward.1} parent=1 // pred_check_branch
      %20 = sbr.rel (0) target = $region13
    $region12: #{itransformer_forward.1} parent=1 // pred_region
      _
    $region13: #{itransformer_forward.1} parent=1 // pred_fallthru
      _
    // Predicated region
    $region14: #{itransformer_forward.1} parent=1 // pred_check
      _
    $region15: #{itransformer_forward.1} parent=1 // pred_check_branch
      %22 = sbr.rel (0) target = $region17
    $region16: #{itransformer_forward.1} parent=1 // pred_region
      %s24 = ssub.s32 12288, 12288
      %25 = vsyncadd [#allocation3], %s24
      %s26 = sshll.u32 [#allocation2], 4
      %s27 = int_to_ptr.vmem [resolvable:$true] %s26
      %32 = dma.hbm_to_vmem [thread:$0]  %s3, 12288, %s27, [#allocation3], 384, 384, 24
    $region17: #{itransformer_forward.1} parent=1 // pred_fallthru
      _
    // Predicated region
    $region18: #{itransformer_forward.1} parent=1 // pred_check
      _
    $region19: #{itransformer_forward.1} parent=1 // pred_check_branch
      %34 = sbr.rel (0) target = $region21
    $region20: #{itransformer_forward.1} parent=1 // pred_region
      _
    $region21: #{itransformer_forward.1} parent=1 // pred_fallthru
      _
    // Predicated region
    $region22: #{itransformer_forward.1} parent=1 // pred_check
      _
    $region23: #{itransformer_forward.1} parent=1 // pred_check_branch
      %36 = sbr.rel (0) target = $region25
    $region24: #{itransformer_forward.1} parent=1 // pred_region
      _
    $region25: #{itransformer_forward.1} parent=1 // pred_fallthru
      _
    // Predicated region
    $region26: #{itransformer_forward.1} parent=1 // pred_check
      _
    $region27: #{itransformer_forward.1} parent=1 // pred_check_branch
      %38 = sbr.rel (0) target = $region29
    $region28: #{itransformer_forward.1} parent=1 // pred_region
      _
    $region29: #{itransformer_forward.1} parent=1 // pred_fallthru
      _
    // Predicated region
    $region30: #{itransformer_forward.1} parent=1 // pred_check
      _
    $region31: #{itransformer_forward.1} parent=1 // pred_check_branch
      %40 = sbr.rel (0) target = $region33
    $region32: #{itransformer_forward.1} parent=1 // pred_region
      _
    $region33: #{itransformer_forward.1} parent=1 // pred_fallthru
      _
    // Predicated region
    $region34: #{itransformer_forward.1} parent=1 // pred_check
      _
    $region35: #{itransformer_forward.1} parent=1 // pred_check_branch
      %42 = sbr.rel (0) target = $region37
    $region36: #{itransformer_forward.1} parent=1 // pred_region
      _
    $region37: #{itransformer_forward.1} parent=1 // pred_fallthru
      _
    // Predicated region
    $region38: #{itransformer_forward.1} parent=1 // pred_check
      _
    $region39: #{itransformer_forward.1} parent=1 // pred_check_branch
      %44 = sbr.rel (0) target = $region41
    $region40: #{itransformer_forward.1} parent=1 // pred_region
      %45 = dma.done [#allocation3], 12288
    $region41: #{itransformer_forward.1} parent=1 // pred_fallthru
      _
    %v47 = vld [vmem:[%s0] sm:$0xff]
    %v48 = vpack.c.bf16 %v47, %v47
    %v49 = vld [vmem:[%s1] sm:$0xf]
    %v50 = vld [vmem:[%s1 + $0x4] sm:$0xf]
    %v51 = vld [vmem:[%s2] sm:$0x1]
    %v53 = vlaneseq
    %v54 = vshrl.u32 %v53, 7
    %v55 = vsub.s32 0, %v54
    %v56 = vrot.slane %v51, %v55
    %v60 = vunpack.c.l.b16 %v49
    %v61 = vunpack.c.l.b16 %v50
    %v62 = vpack.c.b16 %v61, %v60
    %vm64 = vcmask 130048
    %v66 = vsel %vm64, %v48, 0
    %68 = vmatprep.subr.bf16.mxu0 0
    %69 = vmatpush1.bf16.msra.mxu0 0
    %70 = vmatprep.subr.bf16.mxu0 0
    %71 = vmatpush1.bf16.msra.mxu0 0
    %72 = vmatprep.subr.bf16.mxu0 0
    %73 = vmatpush1.bf16.msra.mxu0 0
    %74 = vmatprep.subr.bf16.mxu0 0
    %75 = vmatpush1.bf16.msra.mxu0 0
    %76 = vmatprep.subr.bf16.mxu0 0
    %77 = vmatpush1.bf16.msra.mxu0 0
    %78 = vmatprep.subr.bf16.mxu0 0
    %79 = vmatpush1.bf16.msra.mxu0 0
    %80 = vmatprep.subr.bf16.mxu0 0
    %81 = vmatpush1.bf16.msra.mxu0 0
    %82 = vmatprep.subr.bf16.mxu0 0
    %83 = vmatpush1.bf16.msra.mxu0 %v62
    %84 = vmatprep.subr.bf16.mxu0 0
    %85 = vmatpush2.bf16.msra.mxu0 0
    %86 = vmatprep.subr.bf16.mxu0 0
    %87 = vmatpush2.bf16.msra.mxu0 0
    %88 = vmatprep.subr.bf16.mxu0 0
    %89 = vmatpush2.bf16.msra.mxu0 0
    %90 = vmatprep.subr.bf16.mxu0 0
    %91 = vmatpush2.bf16.msra.mxu0 0
    %92 = vmatprep.subr.bf16.mxu0 0
    %93 = vmatpush2.bf16.msra.mxu0 0
    %94 = vmatprep.subr.bf16.mxu0 0
    %95 = vmatpush2.bf16.msra.mxu0 0
    %96 = vmatprep.subr.bf16.mxu0 0
    %97 = vmatpush2.bf16.msra.mxu0 0
    %98 = vmatprep.subr.bf16.mxu0 0
    %99 = vmatpush2.bf16.msra.mxu0 0
    %100 = vmatprep.mubr.bf16.mxu0 0
    %101 = vmatmul.mubr.bf16.gmra.mxu0 %v66
    %v102 = vpop.f32.mrf.mxu0
    %v103 = vadd.f32 %v56, %v102
    %v104 = vpop.f32.mrf.mxu0
    %v105 = vpop.f32.mrf.mxu0
    %v106 = vpop.f32.mrf.mxu0
    %107 = vdwg.mxu0
    %v108 = vld [vmem:[%s6] sm:$0xff]
    %v109 = vld [vmem:[%s6 + $0x8] sm:$0xff]
    %v110 = vld [vmem:[%s6 + $0x10] sm:$0xff]
    %v111 = vld [vmem:[%s6 + $0x18] sm:$0xff]
    %v112 = vld [vmem:[%s6 + $0x20] sm:$0xff]
    %v113 = vld [vmem:[%s6 + $0x28] sm:$0xff]
    %v114 = vld [vmem:[%s6 + $0x30] sm:$0xff]
    %v115 = vld [vmem:[%s6 + $0x38] sm:$0xff]
    %v116 = vld [vmem:[%s6 + $0x40] sm:$0xff]
    %v117 = vld [vmem:[%s6 + $0x48] sm:$0xff]
    %v118 = vld [vmem:[%s6 + $0x50] sm:$0xff]
    %v119 = vld [vmem:[%s6 + $0x58] sm:$0xff]
    %v120 = vld [vmem:[%s6 + $0x60] sm:$0xff]
    %v121 = vld [vmem:[%s6 + $0x68] sm:$0xff]
    %v122 = vld [vmem:[%s6 + $0x70] sm:$0xff]
    %v123 = vld [vmem:[%s6 + $0x78] sm:$0xff]
    %v124 = vld [vmem:[#allocation2] sm:$0xff]
    %v125 = vld [vmem:[#allocation2 + $0x8] sm:$0xf]
    %v126 = vld [vmem:[#allocation2 + $0x18] sm:$0xff]
    %v127 = vld [vmem:[#allocation2 + $0x20] sm:$0xf]
    %v128 = vld [vmem:[#allocation2 + $0x30] sm:$0xff]
    %v129 = vld [vmem:[#allocation2 + $0x38] sm:$0xf]
    %v130 = vld [vmem:[#allocation2 + $0x48] sm:$0xff]
    %v131 = vld [vmem:[#allocation2 + $0x50] sm:$0xf]
    %v132 = vld [vmem:[#allocation2 + $0x60] sm:$0xff]
    %v133 = vld [vmem:[#allocation2 + $0x68] sm:$0xf]
    %v134 = vld [vmem:[#allocation2 + $0x78] sm:$0xff]
    %v135 = vld [vmem:[#allocation2 + $0x80] sm:$0xf]
    %v136 = vld [vmem:[#allocation2 + $0x90] sm:$0xff]
    %v137 = vld [vmem:[#allocation2 + $0x98] sm:$0xf]
    %v138 = vld [vmem:[#allocation2 + $0xa8] sm:$0xff]
    %v139 = vld [vmem:[#allocation2 + $0xb0] sm:$0xf]
    %v140 = vld [vmem:[#allocation2 + $0xc0] sm:$0xff]
    %v141 = vld [vmem:[#allocation2 + $0xc8] sm:$0xf]
    %v142 = vld [vmem:[#allocation2 + $0xd8] sm:$0xff]
    %v143 = vld [vmem:[#allocation2 + $0xe0] sm:$0xf]
    %v144 = vld [vmem:[#allocation2 + $0xf0] sm:$0xff]
    %v145 = vld [vmem:[#allocation2 + $0xf8] sm:$0xf]
    %v146 = vld [vmem:[#allocation2 + $0x108] sm:$0xff]
    %v147 = vld [vmem:[#allocation2 + $0x110] sm:$0xf]
    %v148 = vld [vmem:[#allocation2 + $0x120] sm:$0xff]
    %v149 = vld [vmem:[#allocation2 + $0x128] sm:$0xf]
    %v150 = vld [vmem:[#allocation2 + $0x138] sm:$0xff]
    %v151 = vld [vmem:[#allocation2 + $0x140] sm:$0xf]
    %v152 = vld [vmem:[#allocation2 + $0x150] sm:$0xff]
    %v153 = vld [vmem:[#allocation2 + $0x158] sm:$0xf]
    %v154 = vld [vmem:[#allocation2 + $0x168] sm:$0xff]
    %v155 = vld [vmem:[#allocation2 + $0x170] sm:$0xf]
    %v156 = vld [vmem:[#allocation2 + $0xc] sm:$0xf]
    %v157 = vld [vmem:[#allocation2 + $0x24] sm:$0xf]
    %v158 = vld [vmem:[#allocation2 + $0x3c] sm:$0xf]
    %v159 = vld [vmem:[#allocation2 + $0x54] sm:$0xf]
    %v160 = vld [vmem:[#allocation2 + $0x6c] sm:$0xf]
    %v161 = vld [vmem:[#allocation2 + $0x84] sm:$0xf]
    %v162 = vld [vmem:[#allocation2 + $0x9c] sm:$0xf]
    %v163 = vld [vmem:[#allocation2 + $0xb4] sm:$0xf]
    %v164 = vld [vmem:[#allocation2 + $0xcc] sm:$0xf]
    %v165 = vld [vmem:[#allocation2 + $0xe4] sm:$0xf]
    %v166 = vld [vmem:[#allocation2 + $0xfc] sm:$0xf]
    %v167 = vld [vmem:[#allocation2 + $0x114] sm:$0xf]
    %v168 = vld [vmem:[#allocation2 + $0x12c] sm:$0xf]
    %v169 = vld [vmem:[#allocation2 + $0x144] sm:$0xf]
    %v170 = vld [vmem:[#allocation2 + $0x15c] sm:$0xf]
    %v171 = vld [vmem:[#allocation2 + $0x174] sm:$0xf]
    %v172 = vld [vmem:[#allocation2 + $0x10] sm:$0xf]
    %v173 = vld [vmem:[#allocation2 + $0x28] sm:$0xf]
    %v174 = vld [vmem:[#allocation2 + $0x40] sm:$0xf]
    %v175 = vld [vmem:[#allocation2 + $0x58] sm:$0xf]
    %v176 = vld [vmem:[#allocation2 + $0x70] sm:$0xf]
    %v177 = vld [vmem:[#allocation2 + $0x88] sm:$0xf]
    %v178 = vld [vmem:[#allocation2 + $0xa0] sm:$0xf]
    %v179 = vld [vmem:[#allocation2 + $0xb8] sm:$0xf]
    %v180 = vld [vmem:[#allocation2 + $0xd0] sm:$0xf]
    %v181 = vld [vmem:[#allocation2 + $0xe8] sm:$0xf]
    %v182 = vld [vmem:[#allocation2 + $0x100] sm:$0xf]
    %v183 = vld [vmem:[#allocation2 + $0x118] sm:$0xf]
    %v184 = vld [vmem:[#allocation2 + $0x130] sm:$0xf]
    %v185 = vld [vmem:[#allocation2 + $0x148] sm:$0xf]
    %v186 = vld [vmem:[#allocation2 + $0x160] sm:$0xf]
    %v187 = vld [vmem:[#allocation2 + $0x178] sm:$0xf]
    %v188 = vld [vmem:[#allocation2 + $0x14] sm:$0xf]
    %v189 = vld [vmem:[#allocation2 + $0x2c] sm:$0xf]
    %v190 = vld [vmem:[#allocation2 + $0x44] sm:$0xf]
    %v191 = vld [vmem:[#allocation2 + $0x5c] sm:$0xf]
    %v192 = vld [vmem:[#allocation2 + $0x74] sm:$0xf]
    %v193 = vld [vmem:[#allocation2 + $0x8c] sm:$0xf]
    %v194 = vld [vmem:[#allocation2 + $0xa4] sm:$0xf]
    %v195 = vld [vmem:[#allocation2 + $0xbc] sm:$0xf]
    %v196 = vld [vmem:[#allocation2 + $0xd4] sm:$0xf]
    %v197 = vld [vmem:[#allocation2 + $0xec] sm:$0xf]
    %v198 = vld [vmem:[#allocation2 + $0x104] sm:$0xf]
    %v199 = vld [vmem:[#allocation2 + $0x11c] sm:$0xf]
    %v200 = vld [vmem:[#allocation2 + $0x134] sm:$0xf]
    %v201 = vld [vmem:[#allocation2 + $0x14c] sm:$0xf]
    %v202 = vld [vmem:[#allocation2 + $0x164] sm:$0xf]
    %v203 = vld [vmem:[#allocation2 + $0x17c] sm:$0xf]
    %v204 = vld [vmem:[%s4] sm:$0x7]
    %v205 = vld [vmem:[%s5] sm:$0x1]
    %v206 = vld [vmem:[%s5 + $0x1] sm:$0x1]
    %v207 = vld [vmem:[%s5 + $0x2] sm:$0x1]
    %v208 = vld [vmem:[%s5 + $0x3] sm:$0x1]
    %v209 = vld [vmem:[%s5 + $0x4] sm:$0x1]
    %v210 = vld [vmem:[%s5 + $0x5] sm:$0x1]
    %v211 = vld [vmem:[%s5 + $0x6] sm:$0x1]
    %v212 = vpack.c.bf16 %v103, %v103
    %v214 = vlaneseq
    %v215 = vshrl.u32 %v214, 7
    %v216 = vsub.s32 0, %v215
    %v217 = vrot.slane %v204, %v216
    %v218 = vlaneseq
    %v219 = vshrl.u32 %v218, 7
    %v220 = vsub.s32 1, %v219
    %v221 = vrot.slane %v204, %v220
    %v222 = vlaneseq
    %v223 = vshrl.u32 %v222, 7
    %v224 = vsub.s32 2, %v223
    %v225 = vrot.slane %v204, %v224
    %v261 = vunpack.c.l.b16 %v124
    %v262 = vunpack.c.h.b16 %v124
    %v263 = vunpack.c.l.b16 %v125
    %v264 = vunpack.c.l.b16 %v126
    %v265 = vunpack.c.h.b16 %v126
    %v266 = vunpack.c.l.b16 %v127
    %v267 = vunpack.c.l.b16 %v128
    %v268 = vunpack.c.h.b16 %v128
    %v269 = vunpack.c.l.b16 %v129
    %v270 = vunpack.c.l.b16 %v130
    %v271 = vunpack.c.h.b16 %v130
    %v272 = vunpack.c.l.b16 %v131
    %v273 = vunpack.c.l.b16 %v132
    %v274 = vunpack.c.h.b16 %v132
    %v275 = vunpack.c.l.b16 %v133
    %v276 = vunpack.c.l.b16 %v134
    %v277 = vunpack.c.h.b16 %v134
    %v278 = vunpack.c.l.b16 %v135
    %v279 = vunpack.c.l.b16 %v136
    %v280 = vunpack.c.h.b16 %v136
    %v281 = vunpack.c.l.b16 %v137
    %v282 = vunpack.c.l.b16 %v138
    %v283 = vunpack.c.h.b16 %v138
    %v284 = vunpack.c.l.b16 %v139
    %v285 = vunpack.c.l.b16 %v140
    %v286 = vunpack.c.h.b16 %v140
    %v287 = vunpack.c.l.b16 %v141
    %v288 = vunpack.c.l.b16 %v142
    %v289 = vunpack.c.h.b16 %v142
    %v290 = vunpack.c.l.b16 %v143
    %v291 = vunpack.c.l.b16 %v144
    %v292 = vunpack.c.h.b16 %v144
    %v293 = vunpack.c.l.b16 %v145
    %v294 = vunpack.c.l.b16 %v146
    %v295 = vunpack.c.h.b16 %v146
    %v296 = vunpack.c.l.b16 %v147
    %v297 = vunpack.c.l.b16 %v148
    %v298 = vunpack.c.h.b16 %v148
    %v299 = vunpack.c.l.b16 %v149
    %v300 = vunpack.c.l.b16 %v150
    %v301 = vunpack.c.h.b16 %v150
    %v302 = vunpack.c.l.b16 %v151
    %v303 = vunpack.c.l.b16 %v152
    %v304 = vunpack.c.h.b16 %v152
    %v305 = vunpack.c.l.b16 %v153
    %v306 = vunpack.c.l.b16 %v154
    %v307 = vunpack.c.h.b16 %v154
    %v308 = vunpack.c.l.b16 %v155
    %v309 = vpack.c.b16 %v264, %v261
    %v310 = vpack.c.b16 %v265, %v262
    %v311 = vpack.c.b16 %v266, %v263
    %v312 = vpack.c.b16 %v270, %v267
    %v313 = vpack.c.b16 %v271, %v268
    %v314 = vpack.c.b16 %v272, %v269
    %v315 = vpack.c.b16 %v276, %v273
    %v316 = vpack.c.b16 %v277, %v274
    %v317 = vpack.c.b16 %v278, %v275
    %v318 = vpack.c.b16 %v282, %v279
    %v319 = vpack.c.b16 %v283, %v280
    %v320 = vpack.c.b16 %v284, %v281
    %v321 = vpack.c.b16 %v288, %v285
    %v322 = vpack.c.b16 %v289, %v286
    %v323 = vpack.c.b16 %v290, %v287
    %v324 = vpack.c.b16 %v294, %v291
    %v325 = vpack.c.b16 %v295, %v292
    %v326 = vpack.c.b16 %v296, %v293
    %v327 = vpack.c.b16 %v300, %v297
    %v328 = vpack.c.b16 %v301, %v298
    %v329 = vpack.c.b16 %v302, %v299
    %v330 = vpack.c.b16 %v306, %v303
    %v331 = vpack.c.b16 %v307, %v304
    %v332 = vpack.c.b16 %v308, %v305
    %357 = vmatprep.subr.bf16.mxu0 %v331
    %358 = vmatpush1.bf16.msra.mxu0 %v330
    %359 = vmatprep.subr.bf16.mxu0 %v328
    %360 = vmatpush1.bf16.msra.mxu0 %v327
    %361 = vmatprep.subr.bf16.mxu0 %v325
    %362 = vmatpush1.bf16.msra.mxu0 %v324
    %363 = vmatprep.subr.bf16.mxu0 %v322
    %364 = vmatpush1.bf16.msra.mxu0 %v321
    %365 = vmatprep.subr.bf16.mxu0 %v319
    %366 = vmatpush1.bf16.msra.mxu0 %v318
    %367 = vmatprep.subr.bf16.mxu0 %v316
    %368 = vmatpush1.bf16.msra.mxu0 %v315
    %369 = vmatprep.subr.bf16.mxu0 %v313
    %370 = vmatpush1.bf16.msra.mxu0 %v312
    %371 = vmatprep.subr.bf16.mxu0 %v310
    %372 = vmatpush1.bf16.msra.mxu0 %v309
    %373 = vmatprep.subr.bf16.mxu0 0
    %374 = vmatpush2.bf16.msra.mxu0 0
    %375 = vmatprep.subr.bf16.mxu0 0
    %376 = vmatpush2.bf16.msra.mxu0 0
    %377 = vmatprep.subr.bf16.mxu0 0
    %378 = vmatpush2.bf16.msra.mxu0 0
    %379 = vmatprep.subr.bf16.mxu0 0
    %380 = vmatpush2.bf16.msra.mxu0 0
    %381 = vmatprep.subr.bf16.mxu0 0
    %382 = vmatpush2.bf16.msra.mxu0 0
    %383 = vmatprep.subr.bf16.mxu0 0
    %384 = vmatpush2.bf16.msra.mxu0 0
    %385 = vmatprep.subr.bf16.mxu0 0
    %386 = vmatpush2.bf16.msra.mxu0 0
    %387 = vmatprep.subr.bf16.mxu0 0
    %388 = vmatpush2.bf16.msra.mxu0 0
    %389 = vmatprep.mubr.bf16.mxu0 0
    %390 = vmatmul.mubr.bf16.gmra.mxu0 %v212
    %v391 = vpop.f32.mrf.mxu0
    %v392 = vadd.f32 %v217, %v391
    %v393 = vpop.f32.mrf.mxu0
    %v394 = vadd.f32 %v221, %v393
    %v395 = vpop.f32.mrf.mxu0
    %v396 = vpop.f32.mrf.mxu0
    %397 = vdwg.mxu0
    %398 = vmatprep.subr.bf16.mxu0 0
    %399 = vmatpush1.bf16.msra.mxu0 %v332
    %400 = vmatprep.subr.bf16.mxu0 0
    %401 = vmatpush1.bf16.msra.mxu0 %v329
    %402 = vmatprep.subr.bf16.mxu0 0
    %403 = vmatpush1.bf16.msra.mxu0 %v326
    %404 = vmatprep.subr.bf16.mxu0 0
    %405 = vmatpush1.bf16.msra.mxu0 %v323
    %406 = vmatprep.subr.bf16.mxu0 0
    %407 = vmatpush1.bf16.msra.mxu0 %v320
    %408 = vmatprep.subr.bf16.mxu0 0
    %409 = vmatpush1.bf16.msra.mxu0 %v317
    %410 = vmatprep.subr.bf16.mxu0 0
    %411 = vmatpush1.bf16.msra.mxu0 %v314
    %412 = vmatprep.subr.bf16.mxu0 0
    %413 = vmatpush1.bf16.msra.mxu0 %v311
    %414 = vmatprep.subr.bf16.mxu0 0
    %415 = vmatpush2.bf16.msra.mxu0 0
    %416 = vmatprep.subr.bf16.mxu0 0
    %417 = vmatpush2.bf16.msra.mxu0 0
    %418 = vmatprep.subr.bf16.mxu0 0
    %419 = vmatpush2.bf16.msra.mxu0 0
    %420 = vmatprep.subr.bf16.mxu0 0
    %421 = vmatpush2.bf16.msra.mxu0 0
    %422 = vmatprep.subr.bf16.mxu0 0
    %423 = vmatpush2.bf16.msra.mxu0 0
    %424 = vmatprep.subr.bf16.mxu0 0
    %425 = vmatpush2.bf16.msra.mxu0 0
    %426 = vmatprep.subr.bf16.mxu0 0
    %427 = vmatpush2.bf16.msra.mxu0 0
    %428 = vmatprep.subr.bf16.mxu0 0
    %429 = vmatpush2.bf16.msra.mxu0 0
    %430 = vmatprep.mubr.bf16.mxu0 0
    %431 = vmatmul.mubr.bf16.gmra.mxu0 %v212
    %v432 = vpop.f32.mrf.mxu0
    %v433 = vadd.f32 %v225, %v432
    %v434 = vpop.f32.mrf.mxu0
    %v435 = vpop.f32.mrf.mxu0
    %v436 = vpop.f32.mrf.mxu0
    %437 = vdwg.mxu0
    %v439 = vcombine.high %v392, %v392
    %v441 = vunpack.c.l.s4 1966171168
    %v442 = vunpack.c.0.s8 %v441
    %v443 = vlaneseq
    %v444 = vshrl.u32 %v443, 7
    %v445 = vsub.s32 %v442, %v444
    %v446 = vrot.slane %v392, %v445
    %v448 = vunpack.c.l.s4 1966171168
    %v449 = vunpack.c.0.s8 %v448
    %v450 = vlaneseq
    %v451 = vshrl.u32 %v450, 7
    %v452 = vsub.s32 %v449, %v451
    %v453 = vrot.slane %v439, %v452
    %v454 = vcombine.high %v446, %v446
    %v455 = vcombine.high %v453, %v453
    %v457 = vunpack.c.l.s4 1966171168
    %v458 = vunpack.c.0.s8 %v457
    %v459 = vlaneseq
    %v460 = vshrl.u32 %v459, 7
    %v461 = vsub.s32 %v458, %v460
    %v462 = vrot.slane %v446, %v461
    %v464 = vunpack.c.l.s4 1966171168
    %v465 = vunpack.c.0.s8 %v464
    %v466 = vlaneseq
    %v467 = vshrl.u32 %v466, 7
    %v468 = vsub.s32 %v465, %v467
    %v469 = vrot.slane %v453, %v468
    %v471 = vunpack.c.l.s4 1966171168
    %v472 = vunpack.c.0.s8 %v471
    %v473 = vlaneseq
    %v474 = vshrl.u32 %v473, 7
    %v475 = vsub.s32 %v472, %v474
    %v476 = vrot.slane %v454, %v475
    %v478 = vunpack.c.l.s4 1966171168
    %v479 = vunpack.c.0.s8 %v478
    %v480 = vlaneseq
    %v481 = vshrl.u32 %v480, 7
    %v482 = vsub.s32 %v479, %v481
    %v483 = vrot.slane %v455, %v482
    %v484 = vcombine.high %v462, %v462
    %v485 = vcombine.high %v469, %v469
    %v486 = vcombine.high %v476, %v476
    %v487 = vcombine.high %v483, %v483
    %v489 = vcombine.high %v394, %v394
    %v491 = vlaneseq
    %v492 = vshrl.u32 %v491, 7
    %v493 = vsub.s32 0, %v492
    %v494 = vrot.slane %v462, %v493
    %v495 = vlaneseq
    %v496 = vshrl.u32 %v495, 7
    %v497 = vsub.s32 0, %v496
    %v498 = vrot.slane %v476, %v497
    %v499 = vlaneseq
    %v500 = vshrl.u32 %v499, 7
    %v501 = vsub.s32 0, %v500
    %v502 = vrot.slane %v484, %v501
    %v503 = vlaneseq
    %v504 = vshrl.u32 %v503, 7
    %v505 = vsub.s32 0, %v504
    %v506 = vrot.slane %v486, %v505
    %v507 = vlaneseq
    %v508 = vshrl.u32 %v507, 7
    %v509 = vsub.s32 0, %v508
    %v510 = vrot.slane %v469, %v509
    %v511 = vlaneseq
    %v512 = vshrl.u32 %v511, 7
    %v513 = vsub.s32 0, %v512
    %v514 = vrot.slane %v483, %v513
    %v515 = vlaneseq
    %v516 = vshrl.u32 %v515, 7
    %v517 = vsub.s32 0, %v516
    %v518 = vrot.slane %v485, %v517
    %v519 = vlaneseq
    %v520 = vshrl.u32 %v519, 7
    %v521 = vsub.s32 0, %v520
    %v522 = vrot.slane %v487, %v521
    %v531 = vmul.f32 %v494, %v394
    %v532 = vmul.f32 %v498, %v394
    %v533 = vmul.f32 %v502, %v394
    %v534 = vmul.f32 %v506, %v394
    %v535 = vmul.f32 %v510, %v489
    %v536 = vmul.f32 %v514, %v489
    %v537 = vmul.f32 %v518, %v489
    %v538 = vmul.f32 %v522, %v489
    %v547 = vcombine.low %v531, %v532
    %v548 = vcombine.low %v533, %v534
    %v549 = vcombine.low %v535, %v536
    %v550 = vcombine.low %v537, %v538
    %555 = vmatprep.subr.mxu0 0.0
    %556 = vmatpush1.msra.mxu0 %v123
    %557 = vmatprep.subr.mxu0 0.0
    %558 = vmatpush1.msra.mxu0 %v122
    %559 = vmatprep.subr.mxu0 0.0
    %560 = vmatpush1.msra.mxu0 %v121
    %561 = vmatprep.subr.mxu0 0.0
    %562 = vmatpush1.msra.mxu0 %v120
    %563 = vmatprep.subr.mxu0 0.0
    %564 = vmatpush1.msra.mxu0 %v119
    %565 = vmatprep.subr.mxu0 0.0
    %566 = vmatpush1.msra.mxu0 %v118
    %567 = vmatprep.subr.mxu0 0.0
    %568 = vmatpush1.msra.mxu0 %v117
    %569 = vmatprep.subr.mxu0 0.0
    %570 = vmatpush1.msra.mxu0 %v116
    %571 = vmatprep.subr.mxu0 0.0
    %572 = vmatpush1.msra.mxu0 %v115
    %573 = vmatprep.subr.mxu0 0.0
    %574 = vmatpush1.msra.mxu0 %v114
    %575 = vmatprep.subr.mxu0 0.0
    %576 = vmatpush1.msra.mxu0 %v113
    %577 = vmatprep.subr.mxu0 0.0
    %578 = vmatpush1.msra.mxu0 %v112
    %579 = vmatprep.subr.mxu0 0.0
    %580 = vmatpush1.msra.mxu0 %v111
    %581 = vmatprep.subr.mxu0 0.0
    %582 = vmatpush1.msra.mxu0 %v110
    %583 = vmatprep.subr.mxu0 0.0
    %584 = vmatpush1.msra.mxu0 %v109
    %585 = vmatprep.subr.mxu0 0.0
    %586 = vmatpush1.msra.mxu0 %v108
    %587 = vmatprep.subr.mxu0 0.0
    %588 = vmatpush2.msra.mxu0 0.0
    %589 = vmatprep.subr.mxu0 0.0
    %590 = vmatpush2.msra.mxu0 0.0
    %591 = vmatprep.subr.mxu0 0.0
    %592 = vmatpush2.msra.mxu0 0.0
    %593 = vmatprep.subr.mxu0 0.0
    %594 = vmatpush2.msra.mxu0 0.0
    %595 = vmatprep.subr.mxu0 0.0
    %596 = vmatpush2.msra.mxu0 0.0
    %597 = vmatprep.subr.mxu0 0.0
    %598 = vmatpush2.msra.mxu0 0.0
    %599 = vmatprep.subr.mxu0 0.0
    %600 = vmatpush2.msra.mxu0 0.0
    %601 = vmatprep.subr.mxu0 0.0
    %602 = vmatpush2.msra.mxu0 0.0
    %603 = vmatprep.subr.mxu0 0.0
    %604 = vmatpush2.msra.mxu0 0.0
    %605 = vmatprep.subr.mxu0 0.0
    %606 = vmatpush2.msra.mxu0 0.0
    %607 = vmatprep.subr.mxu0 0.0
    %608 = vmatpush2.msra.mxu0 0.0
    %609 = vmatprep.subr.mxu0 0.0
    %610 = vmatpush2.msra.mxu0 0.0
    %611 = vmatprep.subr.mxu0 0.0
    %612 = vmatpush2.msra.mxu0 0.0
    %613 = vmatprep.subr.mxu0 0.0
    %614 = vmatpush2.msra.mxu0 0.0
    %615 = vmatprep.subr.mxu0 0.0
    %616 = vmatpush2.msra.mxu0 0.0
    %617 = vmatprep.subr.mxu0 0.0
    %618 = vmatpush2.msra.mxu0 0.0
    %619 = vmatprep.mubr.f32.mxu0 0.0
    %620 = vmatmul.mubr.f32.gmra.mxu0 %v547
    %v621 = vpop.f32.mrf.mxu0
    %v622 = vadd.f32 0.0, %v621
    %v623 = vpop.f32.mrf.mxu0
    %624 = vmatprep.mubr.f32.mxu0 0.0
    %625 = vmatmul.mubr.f32.gmra.mxu0 %v548
    %v626 = vpop.f32.mrf.mxu0
    %v627 = vadd.f32 0.0, %v626
    %v628 = vpop.f32.mrf.mxu0
    %629 = vmatprep.mubr.f32.mxu0 0.0
    %630 = vmatmul.mubr.f32.gmra.mxu0 %v549
    %v631 = vpop.f32.mrf.mxu0
    %v632 = vadd.f32 0.0, %v631
    %v633 = vpop.f32.mrf.mxu0
    %634 = vmatprep.mubr.f32.mxu0 0.0
    %635 = vmatmul.mubr.f32.gmra.mxu0 %v550
    %v636 = vpop.f32.mrf.mxu0
    %v637 = vadd.f32 0.0, %v636
    %v638 = vpop.f32.mrf.mxu0
    %639 = vdwg.mxu0
    %v644 = vcombine.high %v622, %v622
    %v645 = vcombine.high %v627, %v627
    %v646 = vcombine.high %v632, %v632
    %v647 = vcombine.high %v637, %v637
    %vm652 = vcmask 1043456
    %v653 = vsel %vm652, %v622, -inf
    %v654 = vrot.slane %v653, 4
    %v655 = vmax.f32 %v653, %v654
    %v656 = vrot.slane %v655, 2
    %v657 = vmax.f32 %v655, %v656
    %v658 = vrot.slane %v657, 1
    %v659 = vmax.f32 %v657, %v658
    %v660 = vsel %vm652, %v644, -inf
    %v661 = vrot.slane %v660, 4
    %v662 = vmax.f32 %v660, %v661
    %v663 = vrot.slane %v662, 2
    %v664 = vmax.f32 %v662, %v663
    %v665 = vrot.slane %v664, 1
    %v666 = vmax.f32 %v664, %v665
    %v667 = vsel %vm652, %v627, -inf
    %v668 = vrot.slane %v667, 4
    %v669 = vmax.f32 %v667, %v668
    %v670 = vrot.slane %v669, 2
    %v671 = vmax.f32 %v669, %v670
    %v672 = vrot.slane %v671, 1
    %v673 = vmax.f32 %v671, %v672
    %v674 = vsel %vm652, %v645, -inf
    %v675 = vrot.slane %v674, 4
    %v676 = vmax.f32 %v674, %v675
    %v677 = vrot.slane %v676, 2
    %v678 = vmax.f32 %v676, %v677
    %v679 = vrot.slane %v678, 1
    %v680 = vmax.f32 %v678, %v679
    %v681 = vsel %vm652, %v632, -inf
    %v682 = vrot.slane %v681, 4
    %v683 = vmax.f32 %v681, %v682
    %v684 = vrot.slane %v683, 2
    %v685 = vmax.f32 %v683, %v684
    %v686 = vrot.slane %v685, 1
    %v687 = vmax.f32 %v685, %v686
    %v688 = vsel %vm652, %v646, -inf
    %v689 = vrot.slane %v688, 4
    %v690 = vmax.f32 %v688, %v689
    %v691 = vrot.slane %v690, 2
    %v692 = vmax.f32 %v690, %v691
    %v693 = vrot.slane %v692, 1
    %v694 = vmax.f32 %v692, %v693
    %v695 = vsel %vm652, %v637, -inf
    %v696 = vrot.slane %v695, 4
    %v697 = vmax.f32 %v695, %v696
    %v698 = vrot.slane %v697, 2
    %v699 = vmax.f32 %v697, %v698
    %v700 = vrot.slane %v699, 1
    %v701 = vmax.f32 %v699, %v700
    %v702 = vsel %vm652, %v647, -inf
    %v703 = vrot.slane %v702, 4
    %v704 = vmax.f32 %v702, %v703
    %v705 = vrot.slane %v704, 2
    %v706 = vmax.f32 %v704, %v705
    %v707 = vrot.slane %v706, 1
    %v708 = vmax.f32 %v706, %v707
    %v709 = vsub.f32 %v622, %v659
    %v710 = vsub.f32 %v644, %v666
    %v711 = vsub.f32 %v627, %v673
    %v712 = vsub.f32 %v645, %v680
    %v713 = vsub.f32 %v632, %v687
    %v714 = vsub.f32 %v646, %v694
    %v715 = vsub.f32 %v637, %v701
    %v716 = vsub.f32 %v647, %v708
    %v717 = vmul.f32 %v709, 1.442695
    %v718 = vpow.pop %v717
    %v719 = vmul.f32 %v710, 1.442695
    %v720 = vpow.pop %v719
    %v721 = vmul.f32 %v711, 1.442695
    %v722 = vpow.pop %v721
    %v723 = vmul.f32 %v712, 1.442695
    %v724 = vpow.pop %v723
    %v725 = vmul.f32 %v713, 1.442695
    %v726 = vpow.pop %v725
    %v727 = vmul.f32 %v714, 1.442695
    %v728 = vpow.pop %v727
    %v729 = vmul.f32 %v715, 1.442695
    %v730 = vpow.pop %v729
    %v731 = vmul.f32 %v716, 1.442695
    %v732 = vpow.pop %v731
    %v733 = vsel %vm652, %v718, 0.0
    %v734 = vrot.slane %v733, 4
    %v735 = vadd.f32 %v733, %v734
    %v736 = vrot.slane %v735, 2
    %v737 = vadd.f32 %v735, %v736
    %v738 = vrot.slane %v737, 1
    %v739 = vadd.f32 %v737, %v738
    %v740 = vsel %vm652, %v720, 0.0
    %v741 = vrot.slane %v740, 4
    %v742 = vadd.f32 %v740, %v741
    %v743 = vrot.slane %v742, 2
    %v744 = vadd.f32 %v742, %v743
    %v745 = vrot.slane %v744, 1
    %v746 = vadd.f32 %v744, %v745
    %v747 = vsel %vm652, %v722, 0.0
    %v748 = vrot.slane %v747, 4
    %v749 = vadd.f32 %v747, %v748
    %v750 = vrot.slane %v749, 2
    %v751 = vadd.f32 %v749, %v750
    %v752 = vrot.slane %v751, 1
    %v753 = vadd.f32 %v751, %v752
    %v754 = vsel %vm652, %v724, 0.0
    %v755 = vrot.slane %v754, 4
    %v756 = vadd.f32 %v754, %v755
    %v757 = vrot.slane %v756, 2
    %v758 = vadd.f32 %v756, %v757
    %v759 = vrot.slane %v758, 1
    %v760 = vadd.f32 %v758, %v759
    %v761 = vsel %vm652, %v726, 0.0
    %v762 = vrot.slane %v761, 4
    %v763 = vadd.f32 %v761, %v762
    %v764 = vrot.slane %v763, 2
    %v765 = vadd.f32 %v763, %v764
    %v766 = vrot.slane %v765, 1
    %v767 = vadd.f32 %v765, %v766
    %v768 = vsel %vm652, %v728, 0.0
    %v769 = vrot.slane %v768, 4
    %v770 = vadd.f32 %v768, %v769
    %v771 = vrot.slane %v770, 2
    %v772 = vadd.f32 %v770, %v771
    %v773 = vrot.slane %v772, 1
    %v774 = vadd.f32 %v772, %v773
    %v775 = vsel %vm652, %v730, 0.0
    %v776 = vrot.slane %v775, 4
    %v777 = vadd.f32 %v775, %v776
    %v778 = vrot.slane %v777, 2
    %v779 = vadd.f32 %v777, %v778
    %v780 = vrot.slane %v779, 1
    %v781 = vadd.f32 %v779, %v780
    %v782 = vsel %vm652, %v732, 0.0
    %v783 = vrot.slane %v782, 4
    %v784 = vadd.f32 %v782, %v783
    %v785 = vrot.slane %v784, 2
    %v786 = vadd.f32 %v784, %v785
    %v787 = vrot.slane %v786, 1
    %v788 = vadd.f32 %v786, %v787
    %v789 = vrcp.pop %v739
    %v790 = vmul.f32 %v718, %v789
    %v791 = vrcp.pop %v746
    %v792 = vmul.f32 %v720, %v791
    %v793 = vrcp.pop %v753
    %v794 = vmul.f32 %v722, %v793
    %v795 = vrcp.pop %v760
    %v796 = vmul.f32 %v724, %v795
    %v797 = vrcp.pop %v767
    %v798 = vmul.f32 %v726, %v797
    %v799 = vrcp.pop %v774
    %v800 = vmul.f32 %v728, %v799
    %v801 = vrcp.pop %v781
    %v802 = vmul.f32 %v730, %v801
    %v803 = vrcp.pop %v788
    %v804 = vmul.f32 %v732, %v803
    %v806 = vcombine.high %v433, %v433
    %v808 = vmul.f32 %v790, %v433
    %v809 = vmul.f32 %v792, %v433
    %v810 = vmul.f32 %v794, %v433
    %v811 = vmul.f32 %v796, %v433
    %v812 = vmul.f32 %v798, %v806
    %v813 = vmul.f32 %v800, %v806
    %v814 = vmul.f32 %v802, %v806
    %v815 = vmul.f32 %v804, %v806
    %v816 = vsel %vm652, %v808, 0.0
    %v817 = vrot.slane %v816, 4
    %v818 = vadd.f32 %v816, %v817
    %v819 = vrot.slane %v818, 2
    %v820 = vadd.f32 %v818, %v819
    %v821 = vrot.slane %v820, 1
    %v822 = vadd.f32 %v820, %v821
    %v823 = vsel %vm652, %v809, 0.0
    %v824 = vrot.slane %v823, 4
    %v825 = vadd.f32 %v823, %v824
    %v826 = vrot.slane %v825, 2
    %v827 = vadd.f32 %v825, %v826
    %v828 = vrot.slane %v827, 1
    %v829 = vadd.f32 %v827, %v828
    %v830 = vsel %vm652, %v810, 0.0
    %v831 = vrot.slane %v830, 4
    %v832 = vadd.f32 %v830, %v831
    %v833 = vrot.slane %v832, 2
    %v834 = vadd.f32 %v832, %v833
    %v835 = vrot.slane %v834, 1
    %v836 = vadd.f32 %v834, %v835
    %v837 = vsel %vm652, %v811, 0.0
    %v838 = vrot.slane %v837, 4
    %v839 = vadd.f32 %v837, %v838
    %v840 = vrot.slane %v839, 2
    %v841 = vadd.f32 %v839, %v840
    %v842 = vrot.slane %v841, 1
    %v843 = vadd.f32 %v841, %v842
    %v844 = vsel %vm652, %v812, 0.0
    %v845 = vrot.slane %v844, 4
    %v846 = vadd.f32 %v844, %v845
    %v847 = vrot.slane %v846, 2
    %v848 = vadd.f32 %v846, %v847
    %v849 = vrot.slane %v848, 1
    %v850 = vadd.f32 %v848, %v849
    %v851 = vsel %vm652, %v813, 0.0
    %v852 = vrot.slane %v851, 4
    %v853 = vadd.f32 %v851, %v852
    %v854 = vrot.slane %v853, 2
    %v855 = vadd.f32 %v853, %v854
    %v856 = vrot.slane %v855, 1
    %v857 = vadd.f32 %v855, %v856
    %v858 = vsel %vm652, %v814, 0.0
    %v859 = vrot.slane %v858, 4
    %v860 = vadd.f32 %v858, %v859
    %v861 = vrot.slane %v860, 2
    %v862 = vadd.f32 %v860, %v861
    %v863 = vrot.slane %v862, 1
    %v864 = vadd.f32 %v862, %v863
    %v865 = vsel %vm652, %v815, 0.0
    %v866 = vrot.slane %v865, 4
    %v867 = vadd.f32 %v865, %v866
    %v868 = vrot.slane %v867, 2
    %v869 = vadd.f32 %v867, %v868
    %v870 = vrot.slane %v869, 1
    %v871 = vadd.f32 %v869, %v870
    %v872 = vpack.c.bf16 %v822, %v822
    %v873 = vpack.c.bf16 %v829, %v829
    %v874 = vpack.c.bf16 %v836, %v836
    %v875 = vpack.c.bf16 %v843, %v843
    %v876 = vpack.c.bf16 %v850, %v850
    %v877 = vpack.c.bf16 %v857, %v857
    %v878 = vpack.c.bf16 %v864, %v864
    %v879 = vpack.c.bf16 %v871, %v871
    %v880 = vlaneseq
    %v881 = vshrl.u32 %v880, 7
    %v882 = vsub.s32 0, %v881
    %v883 = vrot.slane %v205, %v882
    %v892 = vunpack.c.l.b16 %v872
    %v893 = vunpack.c.l.b16 %v873
    %v894 = vunpack.c.l.b16 %v874
    %v895 = vunpack.c.l.b16 %v875
    %v896 = vunpack.c.l.b16 %v876
    %v897 = vunpack.c.l.b16 %v877
    %v898 = vunpack.c.l.b16 %v878
    %v899 = vunpack.c.l.b16 %v879
    %vm900 = vcmask 1041409
    %v901 = vsel %vm900, %v893, %v892
    %vm902 = vcmask 1042434
    %v903 = vsel %vm902, %v894, %v901
    %vm904 = vcmask 1043459
    %v905 = vsel %vm904, %v895, %v903
    %vm906 = vcmask 1044484
    %v907 = vsel %vm906, %v896, %v905
    %vm908 = vcmask 1045509
    %v909 = vsel %vm908, %v897, %v907
    %vm910 = vcmask 1046534
    %v911 = vsel %vm910, %v898, %v909
    %vm912 = vcmask 1047559
    %v913 = vsel %vm912, %v899, %v911
    %v914 = vpack.c.b16 %v913, %v913
    %v932 = vunpack.c.l.b16 %v156
    %v933 = vunpack.c.l.b16 %v157
    %v934 = vunpack.c.l.b16 %v158
    %v935 = vunpack.c.l.b16 %v159
    %v936 = vunpack.c.l.b16 %v160
    %v937 = vunpack.c.l.b16 %v161
    %v938 = vunpack.c.l.b16 %v162
    %v939 = vunpack.c.l.b16 %v163
    %v940 = vunpack.c.l.b16 %v164
    %v941 = vunpack.c.l.b16 %v165
    %v942 = vunpack.c.l.b16 %v166
    %v943 = vunpack.c.l.b16 %v167
    %v944 = vunpack.c.l.b16 %v168
    %v945 = vunpack.c.l.b16 %v169
    %v946 = vunpack.c.l.b16 %v170
    %v947 = vunpack.c.l.b16 %v171
    %v948 = vpack.c.b16 %v933, %v932
    %v949 = vpack.c.b16 %v935, %v934
    %v950 = vpack.c.b16 %v937, %v936
    %v951 = vpack.c.b16 %v939, %v938
    %v952 = vpack.c.b16 %v941, %v940
    %v953 = vpack.c.b16 %v943, %v942
    %v954 = vpack.c.b16 %v945, %v944
    %v955 = vpack.c.b16 %v947, %v946
    %964 = vmatprep.subr.bf16.mxu0 0
    %965 = vmatpush1.bf16.msra.mxu0 %v955
    %966 = vmatprep.subr.bf16.mxu0 0
    %967 = vmatpush1.bf16.msra.mxu0 %v954
    %968 = vmatprep.subr.bf16.mxu0 0
    %969 = vmatpush1.bf16.msra.mxu0 %v953
    %970 = vmatprep.subr.bf16.mxu0 0
    %971 = vmatpush1.bf16.msra.mxu0 %v952
    %972 = vmatprep.subr.bf16.mxu0 0
    %973 = vmatpush1.bf16.msra.mxu0 %v951
    %974 = vmatprep.subr.bf16.mxu0 0
    %975 = vmatpush1.bf16.msra.mxu0 %v950
    %976 = vmatprep.subr.bf16.mxu0 0
    %977 = vmatpush1.bf16.msra.mxu0 %v949
    %978 = vmatprep.subr.bf16.mxu0 0
    %979 = vmatpush1.bf16.msra.mxu0 %v948
    %980 = vmatprep.subr.bf16.mxu0 0
    %981 = vmatpush2.bf16.msra.mxu0 0
    %982 = vmatprep.subr.bf16.mxu0 0
    %983 = vmatpush2.bf16.msra.mxu0 0
    %984 = vmatprep.subr.bf16.mxu0 0
    %985 = vmatpush2.bf16.msra.mxu0 0
    %986 = vmatprep.subr.bf16.mxu0 0
    %987 = vmatpush2.bf16.msra.mxu0 0
    %988 = vmatprep.subr.bf16.mxu0 0
    %989 = vmatpush2.bf16.msra.mxu0 0
    %990 = vmatprep.subr.bf16.mxu0 0
    %991 = vmatpush2.bf16.msra.mxu0 0
    %992 = vmatprep.subr.bf16.mxu0 0
    %993 = vmatpush2.bf16.msra.mxu0 0
    %994 = vmatprep.subr.bf16.mxu0 0
    %995 = vmatpush2.bf16.msra.mxu0 0
    %996 = vmatprep.mubr.bf16.mxu0 0
    %997 = vmatmul.mubr.bf16.gmra.mxu0 %v914
    %v998 = vpop.f32.mrf.mxu0
    %v999 = vadd.f32 %v883, %v998
    %v1000 = vpop.f32.mrf.mxu0
    %v1001 = vpop.f32.mrf.mxu0
    %v1002 = vpop.f32.mrf.mxu0
    %1003 = vdwg.mxu0
    %v1004 = vadd.f32 %v103, %v999
    %1005 = vadd.xlane.f32.xlu0 %v1004
    %v1006 = vpop.xlane.xlu0 %1005
    %v1007 = vrcp.pop 128.0
    %v1008 = vmul.f32 %v1006, %v1007
    %v1009 = vsub.f32 %v1004, %v1008
    %v1010 = vmul.f32 %v1009, %v1009
    %1011 = vadd.xlane.f32.xlu0 %v1010
    %v1012 = vpop.xlane.xlu0 %1011
    %v1013 = vmul.f32 %v1012, %v1007
    %v1014 = vadd.f32 %v1013, 1e-05
    %v1015 = vrsqrt.pop %v1014
    %v1016 = vmul.f32 %v1009, %v1015
    %v1017 = vlaneseq
    %v1018 = vshrl.u32 %v1017, 7
    %v1019 = vsub.s32 0, %v1018
    %v1020 = vrot.slane %v208, %v1019
    %v1021 = vmul.f32 %v1016, %v1020
    %v1022 = vlaneseq
    %v1023 = vshrl.u32 %v1022, 7
    %v1024 = vsub.s32 0, %v1023
    %v1025 = vrot.slane %v209, %v1024
    %v1026 = vadd.f32 %v1021, %v1025
    %v1027 = vpack.c.bf16 %v1026, %v1026
    %v1028 = vlaneseq
    %v1029 = vshrl.u32 %v1028, 7
    %v1030 = vsub.s32 0, %v1029
    %v1031 = vrot.slane %v206, %v1030
    %v1048 = vunpack.c.l.b16 %v172
    %v1049 = vunpack.c.l.b16 %v173
    %v1050 = vunpack.c.l.b16 %v174
    %v1051 = vunpack.c.l.b16 %v175
    %v1052 = vunpack.c.l.b16 %v176
    %v1053 = vunpack.c.l.b16 %v177
    %v1054 = vunpack.c.l.b16 %v178
    %v1055 = vunpack.c.l.b16 %v179
    %v1056 = vunpack.c.l.b16 %v180
    %v1057 = vunpack.c.l.b16 %v181
    %v1058 = vunpack.c.l.b16 %v182
    %v1059 = vunpack.c.l.b16 %v183
    %v1060 = vunpack.c.l.b16 %v184
    %v1061 = vunpack.c.l.b16 %v185
    %v1062 = vunpack.c.l.b16 %v186
    %v1063 = vunpack.c.l.b16 %v187
    %v1064 = vpack.c.b16 %v1049, %v1048
    %v1065 = vpack.c.b16 %v1051, %v1050
    %v1066 = vpack.c.b16 %v1053, %v1052
    %v1067 = vpack.c.b16 %v1055, %v1054
    %v1068 = vpack.c.b16 %v1057, %v1056
    %v1069 = vpack.c.b16 %v1059, %v1058
    %v1070 = vpack.c.b16 %v1061, %v1060
    %v1071 = vpack.c.b16 %v1063, %v1062
    %1080 = vmatprep.subr.bf16.mxu0 0
    %1081 = vmatpush1.bf16.msra.mxu0 %v1071
    %1082 = vmatprep.subr.bf16.mxu0 0
    %1083 = vmatpush1.bf16.msra.mxu0 %v1070
    %1084 = vmatprep.subr.bf16.mxu0 0
    %1085 = vmatpush1.bf16.msra.mxu0 %v1069
    %1086 = vmatprep.subr.bf16.mxu0 0
    %1087 = vmatpush1.bf16.msra.mxu0 %v1068
    %1088 = vmatprep.subr.bf16.mxu0 0
    %1089 = vmatpush1.bf16.msra.mxu0 %v1067
    %1090 = vmatprep.subr.bf16.mxu0 0
    %1091 = vmatpush1.bf16.msra.mxu0 %v1066
    %1092 = vmatprep.subr.bf16.mxu0 0
    %1093 = vmatpush1.bf16.msra.mxu0 %v1065
    %1094 = vmatprep.subr.bf16.mxu0 0
    %1095 = vmatpush1.bf16.msra.mxu0 %v1064
    %1096 = vmatprep.subr.bf16.mxu0 0
    %1097 = vmatpush2.bf16.msra.mxu0 0
    %1098 = vmatprep.subr.bf16.mxu0 0
    %1099 = vmatpush2.bf16.msra.mxu0 0
    %1100 = vmatprep.subr.bf16.mxu0 0
    %1101 = vmatpush2.bf16.msra.mxu0 0
    %1102 = vmatprep.subr.bf16.mxu0 0
    %1103 = vmatpush2.bf16.msra.mxu0 0
    %1104 = vmatprep.subr.bf16.mxu0 0
    %1105 = vmatpush2.bf16.msra.mxu0 0
    %1106 = vmatprep.subr.bf16.mxu0 0
    %1107 = vmatpush2.bf16.msra.mxu0 0
    %1108 = vmatprep.subr.bf16.mxu0 0
    %1109 = vmatpush2.bf16.msra.mxu0 0
    %1110 = vmatprep.subr.bf16.mxu0 0
    %1111 = vmatpush2.bf16.msra.mxu0 0
    %1112 = vmatprep.mubr.bf16.mxu0 0
    %1113 = vmatmul.mubr.bf16.gmra.mxu0 %v1027
    %v1114 = vpop.f32.mrf.mxu0
    %v1115 = vadd.f32 %v1031, %v1114
    %v1116 = vpop.f32.mrf.mxu0
    %v1117 = vpop.f32.mrf.mxu0
    %v1118 = vpop.f32.mrf.mxu0
    %1119 = vdwg.mxu0
    %v1120 = vmul.f32 %v1115, 0.5
    %v1121 = vmul.f32 %v1115, 0.044715
    %v1122 = vmul.f32 %v1121, %v1115
    %v1123 = vmul.f32 %v1122, %v1115
    %v1124 = vadd.f32 %v1115, %v1123
    %v1125 = vmul.f32 %v1124, 0.7978846
    %v1126 = vtanh.pop %v1125
    %v1127 = vadd.f32 %v1126, 1.0
    %v1128 = vmul.f32 %v1120, %v1127
    %v1129 = vpack.c.bf16 %v1128, %v1128
    %v1130 = vlaneseq
    %v1131 = vshrl.u32 %v1130, 7
    %v1132 = vsub.s32 0, %v1131
    %v1133 = vrot.slane %v207, %v1132
    %v1150 = vunpack.c.l.b16 %v188
    %v1151 = vunpack.c.l.b16 %v189
    %v1152 = vunpack.c.l.b16 %v190
    %v1153 = vunpack.c.l.b16 %v191
    %v1154 = vunpack.c.l.b16 %v192
    %v1155 = vunpack.c.l.b16 %v193
    %v1156 = vunpack.c.l.b16 %v194
    %v1157 = vunpack.c.l.b16 %v195
    %v1158 = vunpack.c.l.b16 %v196
    %v1159 = vunpack.c.l.b16 %v197
    %v1160 = vunpack.c.l.b16 %v198
    %v1161 = vunpack.c.l.b16 %v199
    %v1162 = vunpack.c.l.b16 %v200
    %v1163 = vunpack.c.l.b16 %v201
    %v1164 = vunpack.c.l.b16 %v202
    %v1165 = vunpack.c.l.b16 %v203
    %v1166 = vpack.c.b16 %v1151, %v1150
    %v1167 = vpack.c.b16 %v1153, %v1152
    %v1168 = vpack.c.b16 %v1155, %v1154
    %v1169 = vpack.c.b16 %v1157, %v1156
    %v1170 = vpack.c.b16 %v1159, %v1158
    %v1171 = vpack.c.b16 %v1161, %v1160
    %v1172 = vpack.c.b16 %v1163, %v1162
    %v1173 = vpack.c.b16 %v1165, %v1164
    %1182 = vmatprep.subr.bf16.mxu0 0
    %1183 = vmatpush1.bf16.msra.mxu0 %v1173
    %1184 = vmatprep.subr.bf16.mxu0 0
    %1185 = vmatpush1.bf16.msra.mxu0 %v1172
    %1186 = vmatprep.subr.bf16.mxu0 0
    %1187 = vmatpush1.bf16.msra.mxu0 %v1171
    %1188 = vmatprep.subr.bf16.mxu0 0
    %1189 = vmatpush1.bf16.msra.mxu0 %v1170
    %1190 = vmatprep.subr.bf16.mxu0 0
    %1191 = vmatpush1.bf16.msra.mxu0 %v1169
    %1192 = vmatprep.subr.bf16.mxu0 0
    %1193 = vmatpush1.bf16.msra.mxu0 %v1168
    %1194 = vmatprep.subr.bf16.mxu0 0
    %1195 = vmatpush1.bf16.msra.mxu0 %v1167
    %1196 = vmatprep.subr.bf16.mxu0 0
    %1197 = vmatpush1.bf16.msra.mxu0 %v1166
    %1198 = vmatprep.subr.bf16.mxu0 0
    %1199 = vmatpush2.bf16.msra.mxu0 0
    %1200 = vmatprep.subr.bf16.mxu0 0
    %1201 = vmatpush2.bf16.msra.mxu0 0
    %1202 = vmatprep.subr.bf16.mxu0 0
    %1203 = vmatpush2.bf16.msra.mxu0 0
    %1204 = vmatprep.subr.bf16.mxu0 0
    %1205 = vmatpush2.bf16.msra.mxu0 0
    %1206 = vmatprep.subr.bf16.mxu0 0
    %1207 = vmatpush2.bf16.msra.mxu0 0
    %1208 = vmatprep.subr.bf16.mxu0 0
    %1209 = vmatpush2.bf16.msra.mxu0 0
    %1210 = vmatprep.subr.bf16.mxu0 0
    %1211 = vmatpush2.bf16.msra.mxu0 0
    %1212 = vmatprep.subr.bf16.mxu0 0
    %1213 = vmatpush2.bf16.msra.mxu0 0
    %1214 = vmatprep.mubr.bf16.mxu0 0
    %1215 = vmatmul.mubr.bf16.gmra.mxu0 %v1129
    %v1216 = vpop.f32.mrf.mxu0
    %v1217 = vadd.f32 %v1133, %v1216
    %v1218 = vpop.f32.mrf.mxu0
    %v1219 = vpop.f32.mrf.mxu0
    %v1220 = vpop.f32.mrf.mxu0
    %1221 = vdwg.mxu0
    %v1222 = vadd.f32 %v1026, %v1217
    %1223 = vadd.xlane.f32.xlu0 %v1222
    %v1224 = vpop.xlane.xlu0 %1223
    %v1225 = vmul.f32 %v1224, %v1007
    %v1226 = vsub.f32 %v1222, %v1225
    %v1227 = vmul.f32 %v1226, %v1226
    %1228 = vadd.xlane.f32.xlu0 %v1227
    %v1229 = vpop.xlane.xlu0 %1228
    %v1230 = vmul.f32 %v1229, %v1007
    %v1231 = vadd.f32 %v1230, 1e-05
    %v1232 = vrsqrt.pop %v1231
    %v1233 = vmul.f32 %v1226, %v1232
    %v1234 = vlaneseq
    %v1235 = vshrl.u32 %v1234, 7
    %v1236 = vsub.s32 0, %v1235
    %v1237 = vrot.slane %v210, %v1236
    %v1238 = vmul.f32 %v1233, %v1237
    %v1239 = vlaneseq
    %v1240 = vshrl.u32 %v1239, 7
    %v1241 = vsub.s32 0, %v1240
    %v1242 = vrot.slane %v211, %v1241
    %v1243 = vadd.f32 %v1238, %v1242
    %s1244 = scalar_lea.vmem [#allocation2], 384
    %v1245 = vld [vmem:[%s1244] sm:$0xff]
    %v1246 = vld [vmem:[%s1244 + $0x8] sm:$0xf]
    %v1247 = vld [vmem:[%s1244 + $0x18] sm:$0xff]
    %v1248 = vld [vmem:[%s1244 + $0x20] sm:$0xf]
    %v1249 = vld [vmem:[%s1244 + $0x30] sm:$0xff]
    %v1250 = vld [vmem:[%s1244 + $0x38] sm:$0xf]
    %v1251 = vld [vmem:[%s1244 + $0x48] sm:$0xff]
    %v1252 = vld [vmem:[%s1244 + $0x50] sm:$0xf]
    %v1253 = vld [vmem:[%s1244 + $0x60] sm:$0xff]
    %v1254 = vld [vmem:[%s1244 + $0x68] sm:$0xf]
    %v1255 = vld [vmem:[%s1244 + $0x78] sm:$0xff]
    %v1256 = vld [vmem:[%s1244 + $0x80] sm:$0xf]
    %v1257 = vld [vmem:[%s1244 + $0x90] sm:$0xff]
    %v1258 = vld [vmem:[%s1244 + $0x98] sm:$0xf]
    %v1259 = vld [vmem:[%s1244 + $0xa8] sm:$0xff]
    %v1260 = vld [vmem:[%s1244 + $0xb0] sm:$0xf]
    %v1261 = vld [vmem:[%s1244 + $0xc0] sm:$0xff]
    %v1262 = vld [vmem:[%s1244 + $0xc8] sm:$0xf]
    %v1263 = vld [vmem:[%s1244 + $0xd8] sm:$0xff]
    %v1264 = vld [vmem:[%s1244 + $0xe0] sm:$0xf]
    %v1265 = vld [vmem:[%s1244 + $0xf0] sm:$0xff]
    %v1266 = vld [vmem:[%s1244 + $0xf8] sm:$0xf]
    %v1267 = vld [vmem:[%s1244 + $0x108] sm:$0xff]
    %v1268 = vld [vmem:[%s1244 + $0x110] sm:$0xf]
    %v1269 = vld [vmem:[%s1244 + $0x120] sm:$0xff]
    %v1270 = vld [vmem:[%s1244 + $0x128] sm:$0xf]
    %v1271 = vld [vmem:[%s1244 + $0x138] sm:$0xff]
    %v1272 = vld [vmem:[%s1244 + $0x140] sm:$0xf]
    %v1273 = vld [vmem:[%s1244 + $0x150] sm:$0xff]
    %v1274 = vld [vmem:[%s1244 + $0x158] sm:$0xf]
    %v1275 = vld [vmem:[%s1244 + $0x168] sm:$0xff]
    %v1276 = vld [vmem:[%s1244 + $0x170] sm:$0xf]
    %v1277 = vld [vmem:[%s1244 + $0xc] sm:$0xf]
    %v1278 = vld [vmem:[%s1244 + $0x24] sm:$0xf]
    %v1279 = vld [vmem:[%s1244 + $0x3c] sm:$0xf]
    %v1280 = vld [vmem:[%s1244 + $0x54] sm:$0xf]
    %v1281 = vld [vmem:[%s1244 + $0x6c] sm:$0xf]
    %v1282 = vld [vmem:[%s1244 + $0x84] sm:$0xf]
    %v1283 = vld [vmem:[%s1244 + $0x9c] sm:$0xf]
    %v1284 = vld [vmem:[%s1244 + $0xb4] sm:$0xf]
    %v1285 = vld [vmem:[%s1244 + $0xcc] sm:$0xf]
    %v1286 = vld [vmem:[%s1244 + $0xe4] sm:$0xf]
    %v1287 = vld [vmem:[%s1244 + $0xfc] sm:$0xf]
    %v1288 = vld [vmem:[%s1244 + $0x114] sm:$0xf]
    %v1289 = vld [vmem:[%s1244 + $0x12c] sm:$0xf]
    %v1290 = vld [vmem:[%s1244 + $0x144] sm:$0xf]
    %v1291 = vld [vmem:[%s1244 + $0x15c] sm:$0xf]
    %v1292 = vld [vmem:[%s1244 + $0x174] sm:$0xf]
    %v1293 = vld [vmem:[%s1244 + $0x10] sm:$0xf]
    %v1294 = vld [vmem:[%s1244 + $0x28] sm:$0xf]
    %v1295 = vld [vmem:[%s1244 + $0x40] sm:$0xf]
    %v1296 = vld [vmem:[%s1244 + $0x58] sm:$0xf]
    %v1297 = vld [vmem:[%s1244 + $0x70] sm:$0xf]
    %v1298 = vld [vmem:[%s1244 + $0x88] sm:$0xf]
    %v1299 = vld [vmem:[%s1244 + $0xa0] sm:$0xf]
    %v1300 = vld [vmem:[%s1244 + $0xb8] sm:$0xf]
    %v1301 = vld [vmem:[%s1244 + $0xd0] sm:$0xf]
    %v1302 = vld [vmem:[%s1244 + $0xe8] sm:$0xf]
    %v1303 = vld [vmem:[%s1244 + $0x100] sm:$0xf]
    %v1304 = vld [vmem:[%s1244 + $0x118] sm:$0xf]
    %v1305 = vld [vmem:[%s1244 + $0x130] sm:$0xf]
    %v1306 = vld [vmem:[%s1244 + $0x148] sm:$0xf]
    %v1307 = vld [vmem:[%s1244 + $0x160] sm:$0xf]
    %v1308 = vld [vmem:[%s1244 + $0x178] sm:$0xf]
    %v1309 = vld [vmem:[%s1244 + $0x14] sm:$0xf]
    %v1310 = vld [vmem:[%s1244 + $0x2c] sm:$0xf]
    %v1311 = vld [vmem:[%s1244 + $0x44] sm:$0xf]
    %v1312 = vld [vmem:[%s1244 + $0x5c] sm:$0xf]
    %v1313 = vld [vmem:[%s1244 + $0x74] sm:$0xf]
    %v1314 = vld [vmem:[%s1244 + $0x8c] sm:$0xf]
    %v1315 = vld [vmem:[%s1244 + $0xa4] sm:$0xf]
    %v1316 = vld [vmem:[%s1244 + $0xbc] sm:$0xf]
    %v1317 = vld [vmem:[%s1244 + $0xd4] sm:$0xf]
    %v1318 = vld [vmem:[%s1244 + $0xec] sm:$0xf]
    %v1319 = vld [vmem:[%s1244 + $0x104] sm:$0xf]
    %v1320 = vld [vmem:[%s1244 + $0x11c] sm:$0xf]
    %v1321 = vld [vmem:[%s1244 + $0x134] sm:$0xf]
    %v1322 = vld [vmem:[%s1244 + $0x14c] sm:$0xf]
    %v1323 = vld [vmem:[%s1244 + $0x164] sm:$0xf]
    %v1324 = vld [vmem:[%s1244 + $0x17c] sm:$0xf]
    %s1325 = scalar_lea.vmem %s4, 3
    %v1326 = vld [vmem:[%s1325] sm:$0x7]
    %s1327 = scalar_lea.vmem %s5, 8
    %v1328 = vld [vmem:[%s1327] sm:$0x1]
    %v1329 = vld [vmem:[%s1327 + $0x1] sm:$0x1]
    %v1330 = vld [vmem:[%s1327 + $0x2] sm:$0x1]
    %v1331 = vld [vmem:[%s1327 + $0x3] sm:$0x1]
    %v1332 = vld [vmem:[%s1327 + $0x4] sm:$0x1]
    %v1333 = vld [vmem:[%s1327 + $0x5] sm:$0x1]
    %v1334 = vld [vmem:[%s1327 + $0x6] sm:$0x1]
    %v1335 = vpack.c.bf16 %v1243, %v1243
    %v1337 = vlaneseq
    %v1338 = vshrl.u32 %v1337, 7
    %v1339 = vsub.s32 0, %v1338
    %v1340 = vrot.slane %v1326, %v1339
    %v1341 = vlaneseq
    %v1342 = vshrl.u32 %v1341, 7
    %v1343 = vsub.s32 1, %v1342
    %v1344 = vrot.slane %v1326, %v1343
    %v1345 = vlaneseq
    %v1346 = vshrl.u32 %v1345, 7
    %v1347 = vsub.s32 2, %v1346
    %v1348 = vrot.slane %v1326, %v1347
    %v1384 = vunpack.c.l.b16 %v1245
    %v1385 = vunpack.c.h.b16 %v1245
    %v1386 = vunpack.c.l.b16 %v1246
    %v1387 = vunpack.c.l.b16 %v1247
    %v1388 = vunpack.c.h.b16 %v1247
    %v1389 = vunpack.c.l.b16 %v1248
    %v1390 = vunpack.c.l.b16 %v1249
    %v1391 = vunpack.c.h.b16 %v1249
    %v1392 = vunpack.c.l.b16 %v1250
    %v1393 = vunpack.c.l.b16 %v1251
    %v1394 = vunpack.c.h.b16 %v1251
    %v1395 = vunpack.c.l.b16 %v1252
    %v1396 = vunpack.c.l.b16 %v1253
    %v1397 = vunpack.c.h.b16 %v1253
    %v1398 = vunpack.c.l.b16 %v1254
    %v1399 = vunpack.c.l.b16 %v1255
    %v1400 = vunpack.c.h.b16 %v1255
    %v1401 = vunpack.c.l.b16 %v1256
    %v1402 = vunpack.c.l.b16 %v1257
    %v1403 = vunpack.c.h.b16 %v1257
    %v1404 = vunpack.c.l.b16 %v1258
    %v1405 = vunpack.c.l.b16 %v1259
    %v1406 = vunpack.c.h.b16 %v1259
    %v1407 = vunpack.c.l.b16 %v1260
    %v1408 = vunpack.c.l.b16 %v1261
    %v1409 = vunpack.c.h.b16 %v1261
    %v1410 = vunpack.c.l.b16 %v1262
    %v1411 = vunpack.c.l.b16 %v1263
    %v1412 = vunpack.c.h.b16 %v1263
    %v1413 = vunpack.c.l.b16 %v1264
    %v1414 = vunpack.c.l.b16 %v1265
    %v1415 = vunpack.c.h.b16 %v1265
    %v1416 = vunpack.c.l.b16 %v1266
    %v1417 = vunpack.c.l.b16 %v1267
    %v1418 = vunpack.c.h.b16 %v1267
    %v1419 = vunpack.c.l.b16 %v1268
    %v1420 = vunpack.c.l.b16 %v1269
    %v1421 = vunpack.c.h.b16 %v1269
    %v1422 = vunpack.c.l.b16 %v1270
    %v1423 = vunpack.c.l.b16 %v1271
    %v1424 = vunpack.c.h.b16 %v1271
    %v1425 = vunpack.c.l.b16 %v1272
    %v1426 = vunpack.c.l.b16 %v1273
    %v1427 = vunpack.c.h.b16 %v1273
    %v1428 = vunpack.c.l.b16 %v1274
    %v1429 = vunpack.c.l.b16 %v1275
    %v1430 = vunpack.c.h.b16 %v1275
    %v1431 = vunpack.c.l.b16 %v1276
    %v1432 = vpack.c.b16 %v1387, %v1384
    %v1433 = vpack.c.b16 %v1388, %v1385
    %v1434 = vpack.c.b16 %v1389, %v1386
    %v1435 = vpack.c.b16 %v1393, %v1390
    %v1436 = vpack.c.b16 %v1394, %v1391
    %v1437 = vpack.c.b16 %v1395, %v1392
    %v1438 = vpack.c.b16 %v1399, %v1396
    %v1439 = vpack.c.b16 %v1400, %v1397
    %v1440 = vpack.c.b16 %v1401, %v1398
    %v1441 = vpack.c.b16 %v1405, %v1402
    %v1442 = vpack.c.b16 %v1406, %v1403
    %v1443 = vpack.c.b16 %v1407, %v1404
    %v1444 = vpack.c.b16 %v1411, %v1408
    %v1445 = vpack.c.b16 %v1412, %v1409
    %v1446 = vpack.c.b16 %v1413, %v1410
    %v1447 = vpack.c.b16 %v1417, %v1414
    %v1448 = vpack.c.b16 %v1418, %v1415
    %v1449 = vpack.c.b16 %v1419, %v1416
    %v1450 = vpack.c.b16 %v1423, %v1420
    %v1451 = vpack.c.b16 %v1424, %v1421
    %v1452 = vpack.c.b16 %v1425, %v1422
    %v1453 = vpack.c.b16 %v1429, %v1426
    %v1454 = vpack.c.b16 %v1430, %v1427
    %v1455 = vpack.c.b16 %v1431, %v1428
    %1480 = vmatprep.subr.bf16.mxu0 %v1454
    %1481 = vmatpush1.bf16.msra.mxu0 %v1453
    %1482 = vmatprep.subr.bf16.mxu0 %v1451
    %1483 = vmatpush1.bf16.msra.mxu0 %v1450
    %1484 = vmatprep.subr.bf16.mxu0 %v1448
    %1485 = vmatpush1.bf16.msra.mxu0 %v1447
    %1486 = vmatprep.subr.bf16.mxu0 %v1445
    %1487 = vmatpush1.bf16.msra.mxu0 %v1444
    %1488 = vmatprep.subr.bf16.mxu0 %v1442
    %1489 = vmatpush1.bf16.msra.mxu0 %v1441
    %1490 = vmatprep.subr.bf16.mxu0 %v1439
    %1491 = vmatpush1.bf16.msra.mxu0 %v1438
    %1492 = vmatprep.subr.bf16.mxu0 %v1436
    %1493 = vmatpush1.bf16.msra.mxu0 %v1435
    %1494 = vmatprep.subr.bf16.mxu0 %v1433
    %1495 = vmatpush1.bf16.msra.mxu0 %v1432
    %1496 = vmatprep.subr.bf16.mxu0 0
    %1497 = vmatpush2.bf16.msra.mxu0 0
    %1498 = vmatprep.subr.bf16.mxu0 0
    %1499 = vmatpush2.bf16.msra.mxu0 0
    %1500 = vmatprep.subr.bf16.mxu0 0
    %1501 = vmatpush2.bf16.msra.mxu0 0
    %1502 = vmatprep.subr.bf16.mxu0 0
    %1503 = vmatpush2.bf16.msra.mxu0 0
    %1504 = vmatprep.subr.bf16.mxu0 0
    %1505 = vmatpush2.bf16.msra.mxu0 0
    %1506 = vmatprep.subr.bf16.mxu0 0
    %1507 = vmatpush2.bf16.msra.mxu0 0
    %1508 = vmatprep.subr.bf16.mxu0 0
    %1509 = vmatpush2.bf16.msra.mxu0 0
    %1510 = vmatprep.subr.bf16.mxu0 0
    %1511 = vmatpush2.bf16.msra.mxu0 0
    %1512 = vmatprep.mubr.bf16.mxu0 0
    %1513 = vmatmul.mubr.bf16.gmra.mxu0 %v1335
    %v1514 = vpop.f32.mrf.mxu0
    %v1515 = vadd.f32 %v1340, %v1514
    %v1516 = vpop.f32.mrf.mxu0
    %v1517 = vadd.f32 %v1344, %v1516
    %v1518 = vpop.f32.mrf.mxu0
    %v1519 = vpop.f32.mrf.mxu0
    %1520 = vdwg.mxu0
    %1521 = vmatprep.subr.bf16.mxu0 0
    %1522 = vmatpush1.bf16.msra.mxu0 %v1455
    %1523 = vmatprep.subr.bf16.mxu0 0
    %1524 = vmatpush1.bf16.msra.mxu0 %v1452
    %1525 = vmatprep.subr.bf16.mxu0 0
    %1526 = vmatpush1.bf16.msra.mxu0 %v1449
    %1527 = vmatprep.subr.bf16.mxu0 0
    %1528 = vmatpush1.bf16.msra.mxu0 %v1446
    %1529 = vmatprep.subr.bf16.mxu0 0
    %1530 = vmatpush1.bf16.msra.mxu0 %v1443
    %1531 = vmatprep.subr.bf16.mxu0 0
    %1532 = vmatpush1.bf16.msra.mxu0 %v1440
    %1533 = vmatprep.subr.bf16.mxu0 0
    %1534 = vmatpush1.bf16.msra.mxu0 %v1437
    %1535 = vmatprep.subr.bf16.mxu0 0
    %1536 = vmatpush1.bf16.msra.mxu0 %v1434
    %1537 = vmatprep.subr.bf16.mxu0 0
    %1538 = vmatpush2.bf16.msra.mxu0 0
    %1539 = vmatprep.subr.bf16.mxu0 0
    %1540 = vmatpush2.bf16.msra.mxu0 0
    %1541 = vmatprep.subr.bf16.mxu0 0
    %1542 = vmatpush2.bf16.msra.mxu0 0
    %1543 = vmatprep.subr.bf16.mxu0 0
    %1544 = vmatpush2.bf16.msra.mxu0 0
    %1545 = vmatprep.subr.bf16.mxu0 0
    %1546 = vmatpush2.bf16.msra.mxu0 0
    %1547 = vmatprep.subr.bf16.mxu0 0
    %1548 = vmatpush2.bf16.msra.mxu0 0
    %1549 = vmatprep.subr.bf16.mxu0 0
    %1550 = vmatpush2.bf16.msra.mxu0 0
    %1551 = vmatprep.subr.bf16.mxu0 0
    %1552 = vmatpush2.bf16.msra.mxu0 0
    %1553 = vmatprep.mubr.bf16.mxu0 0
    %1554 = vmatmul.mubr.bf16.gmra.mxu0 %v1335
    %v1555 = vpop.f32.mrf.mxu0
    %v1556 = vadd.f32 %v1348, %v1555
    %v1557 = vpop.f32.mrf.mxu0
    %v1558 = vpop.f32.mrf.mxu0
    %v1559 = vpop.f32.mrf.mxu0
    %1560 = vdwg.mxu0
    %v1562 = vcombine.high %v1515, %v1515
    %v1564 = vunpack.c.l.s4 1966171168
    %v1565 = vunpack.c.0.s8 %v1564
    %v1566 = vlaneseq
    %v1567 = vshrl.u32 %v1566, 7
    %v1568 = vsub.s32 %v1565, %v1567
    %v1569 = vrot.slane %v1515, %v1568
    %v1571 = vunpack.c.l.s4 1966171168
    %v1572 = vunpack.c.0.s8 %v1571
    %v1573 = vlaneseq
    %v1574 = vshrl.u32 %v1573, 7
    %v1575 = vsub.s32 %v1572, %v1574
    %v1576 = vrot.slane %v1562, %v1575
    %v1577 = vcombine.high %v1569, %v1569
    %v1578 = vcombine.high %v1576, %v1576
    %v1580 = vunpack.c.l.s4 1966171168
    %v1581 = vunpack.c.0.s8 %v1580
    %v1582 = vlaneseq
    %v1583 = vshrl.u32 %v1582, 7
    %v1584 = vsub.s32 %v1581, %v1583
    %v1585 = vrot.slane %v1569, %v1584
    %v1587 = vunpack.c.l.s4 1966171168
    %v1588 = vunpack.c.0.s8 %v1587
    %v1589 = vlaneseq
    %v1590 = vshrl.u32 %v1589, 7
    %v1591 = vsub.s32 %v1588, %v1590
    %v1592 = vrot.slane %v1576, %v1591
    %v1594 = vunpack.c.l.s4 1966171168
    %v1595 = vunpack.c.0.s8 %v1594
    %v1596 = vlaneseq
    %v1597 = vshrl.u32 %v1596, 7
    %v1598 = vsub.s32 %v1595, %v1597
    %v1599 = vrot.slane %v1577, %v1598
    %v1601 = vunpack.c.l.s4 1966171168
    %v1602 = vunpack.c.0.s8 %v1601
    %v1603 = vlaneseq
    %v1604 = vshrl.u32 %v1603, 7
    %v1605 = vsub.s32 %v1602, %v1604
    %v1606 = vrot.slane %v1578, %v1605
    %v1607 = vcombine.high %v1585, %v1585
    %v1608 = vcombine.high %v1592, %v1592
    %v1609 = vcombine.high %v1599, %v1599
    %v1610 = vcombine.high %v1606, %v1606
    %v1612 = vcombine.high %v1517, %v1517
    %v1614 = vlaneseq
    %v1615 = vshrl.u32 %v1614, 7
    %v1616 = vsub.s32 0, %v1615
    %v1617 = vrot.slane %v1585, %v1616
    %v1618 = vlaneseq
    %v1619 = vshrl.u32 %v1618, 7
    %v1620 = vsub.s32 0, %v1619
    %v1621 = vrot.slane %v1599, %v1620
    %v1622 = vlaneseq
    %v1623 = vshrl.u32 %v1622, 7
    %v1624 = vsub.s32 0, %v1623
    %v1625 = vrot.slane %v1607, %v1624
    %v1626 = vlaneseq
    %v1627 = vshrl.u32 %v1626, 7
    %v1628 = vsub.s32 0, %v1627
    %v1629 = vrot.slane %v1609, %v1628
    %v1630 = vlaneseq
    %v1631 = vshrl.u32 %v1630, 7
    %v1632 = vsub.s32 0, %v1631
    %v1633 = vrot.slane %v1592, %v1632
    %v1634 = vlaneseq
    %v1635 = vshrl.u32 %v1634, 7
    %v1636 = vsub.s32 0, %v1635
    %v1637 = vrot.slane %v1606, %v1636
    %v1638 = vlaneseq
    %v1639 = vshrl.u32 %v1638, 7
    %v1640 = vsub.s32 0, %v1639
    %v1641 = vrot.slane %v1608, %v1640
    %v1642 = vlaneseq
    %v1643 = vshrl.u32 %v1642, 7
    %v1644 = vsub.s32 0, %v1643
    %v1645 = vrot.slane %v1610, %v1644
    %v1654 = vmul.f32 %v1617, %v1517
    %v1655 = vmul.f32 %v1621, %v1517
    %v1656 = vmul.f32 %v1625, %v1517
    %v1657 = vmul.f32 %v1629, %v1517
    %v1658 = vmul.f32 %v1633, %v1612
    %v1659 = vmul.f32 %v1637, %v1612
    %v1660 = vmul.f32 %v1641, %v1612
    %v1661 = vmul.f32 %v1645, %v1612
    %v1670 = vcombine.low %v1654, %v1655
    %v1671 = vcombine.low %v1656, %v1657
    %v1672 = vcombine.low %v1658, %v1659
    %v1673 = vcombine.low %v1660, %v1661
    %1678 = vmatprep.subr.mxu0 0.0
    %1679 = vmatpush1.msra.mxu0 %v123
    %1680 = vmatprep.subr.mxu0 0.0
    %1681 = vmatpush1.msra.mxu0 %v122
    %1682 = vmatprep.subr.mxu0 0.0
    %1683 = vmatpush1.msra.mxu0 %v121
    %1684 = vmatprep.subr.mxu0 0.0
    %1685 = vmatpush1.msra.mxu0 %v120
    %1686 = vmatprep.subr.mxu0 0.0
    %1687 = vmatpush1.msra.mxu0 %v119
    %1688 = vmatprep.subr.mxu0 0.0
    %1689 = vmatpush1.msra.mxu0 %v118
    %1690 = vmatprep.subr.mxu0 0.0
    %1691 = vmatpush1.msra.mxu0 %v117
    %1692 = vmatprep.subr.mxu0 0.0
    %1693 = vmatpush1.msra.mxu0 %v116
    %1694 = vmatprep.subr.mxu0 0.0
    %1695 = vmatpush1.msra.mxu0 %v115
    %1696 = vmatprep.subr.mxu0 0.0
    %1697 = vmatpush1.msra.mxu0 %v114
    %1698 = vmatprep.subr.mxu0 0.0
    %1699 = vmatpush1.msra.mxu0 %v113
    %1700 = vmatprep.subr.mxu0 0.0
    %1701 = vmatpush1.msra.mxu0 %v112
    %1702 = vmatprep.subr.mxu0 0.0
    %1703 = vmatpush1.msra.mxu0 %v111
    %1704 = vmatprep.subr.mxu0 0.0
    %1705 = vmatpush1.msra.mxu0 %v110
    %1706 = vmatprep.subr.mxu0 0.0
    %1707 = vmatpush1.msra.mxu0 %v109
    %1708 = vmatprep.subr.mxu0 0.0
    %1709 = vmatpush1.msra.mxu0 %v108
    %1710 = vmatprep.subr.mxu0 0.0
    %1711 = vmatpush2.msra.mxu0 0.0
    %1712 = vmatprep.subr.mxu0 0.0
    %1713 = vmatpush2.msra.mxu0 0.0
    %1714 = vmatprep.subr.mxu0 0.0
    %1715 = vmatpush2.msra.mxu0 0.0
    %1716 = vmatprep.subr.mxu0 0.0
    %1717 = vmatpush2.msra.mxu0 0.0
    %1718 = vmatprep.subr.mxu0 0.0
    %1719 = vmatpush2.msra.mxu0 0.0
    %1720 = vmatprep.subr.mxu0 0.0
    %1721 = vmatpush2.msra.mxu0 0.0
    %1722 = vmatprep.subr.mxu0 0.0
    %1723 = vmatpush2.msra.mxu0 0.0
    %1724 = vmatprep.subr.mxu0 0.0
    %1725 = vmatpush2.msra.mxu0 0.0
    %1726 = vmatprep.subr.mxu0 0.0
    %1727 = vmatpush2.msra.mxu0 0.0
    %1728 = vmatprep.subr.mxu0 0.0
    %1729 = vmatpush2.msra.mxu0 0.0
    %1730 = vmatprep.subr.mxu0 0.0
    %1731 = vmatpush2.msra.mxu0 0.0
    %1732 = vmatprep.subr.mxu0 0.0
    %1733 = vmatpush2.msra.mxu0 0.0
    %1734 = vmatprep.subr.mxu0 0.0
    %1735 = vmatpush2.msra.mxu0 0.0
    %1736 = vmatprep.subr.mxu0 0.0
    %1737 = vmatpush2.msra.mxu0 0.0
    %1738 = vmatprep.subr.mxu0 0.0
    %1739 = vmatpush2.msra.mxu0 0.0
    %1740 = vmatprep.subr.mxu0 0.0
    %1741 = vmatpush2.msra.mxu0 0.0
    %1742 = vmatprep.mubr.f32.mxu0 0.0
    %1743 = vmatmul.mubr.f32.gmra.mxu0 %v1670
    %v1744 = vpop.f32.mrf.mxu0
    %v1745 = vadd.f32 0.0, %v1744
    %v1746 = vpop.f32.mrf.mxu0
    %1747 = vmatprep.mubr.f32.mxu0 0.0
    %1748 = vmatmul.mubr.f32.gmra.mxu0 %v1671
    %v1749 = vpop.f32.mrf.mxu0
    %v1750 = vadd.f32 0.0, %v1749
    %v1751 = vpop.f32.mrf.mxu0
    %1752 = vmatprep.mubr.f32.mxu0 0.0
    %1753 = vmatmul.mubr.f32.gmra.mxu0 %v1672
    %v1754 = vpop.f32.mrf.mxu0
    %v1755 = vadd.f32 0.0, %v1754
    %v1756 = vpop.f32.mrf.mxu0
    %1757 = vmatprep.mubr.f32.mxu0 0.0
    %1758 = vmatmul.mubr.f32.gmra.mxu0 %v1673
    %v1759 = vpop.f32.mrf.mxu0
    %v1760 = vadd.f32 0.0, %v1759
    %v1761 = vpop.f32.mrf.mxu0
    %1762 = vdwg.mxu0
    %v1767 = vcombine.high %v1745, %v1745
    %v1768 = vcombine.high %v1750, %v1750
    %v1769 = vcombine.high %v1755, %v1755
    %v1770 = vcombine.high %v1760, %v1760
    %v1775 = vsel %vm652, %v1745, -inf
    %v1776 = vrot.slane %v1775, 4
    %v1777 = vmax.f32 %v1775, %v1776
    %v1778 = vrot.slane %v1777, 2
    %v1779 = vmax.f32 %v1777, %v1778
    %v1780 = vrot.slane %v1779, 1
    %v1781 = vmax.f32 %v1779, %v1780
    %v1782 = vsel %vm652, %v1767, -inf
    %v1783 = vrot.slane %v1782, 4
    %v1784 = vmax.f32 %v1782, %v1783
    %v1785 = vrot.slane %v1784, 2
    %v1786 = vmax.f32 %v1784, %v1785
    %v1787 = vrot.slane %v1786, 1
    %v1788 = vmax.f32 %v1786, %v1787
    %v1789 = vsel %vm652, %v1750, -inf
    %v1790 = vrot.slane %v1789, 4
    %v1791 = vmax.f32 %v1789, %v1790
    %v1792 = vrot.slane %v1791, 2
    %v1793 = vmax.f32 %v1791, %v1792
    %v1794 = vrot.slane %v1793, 1
    %v1795 = vmax.f32 %v1793, %v1794
    %v1796 = vsel %vm652, %v1768, -inf
    %v1797 = vrot.slane %v1796, 4
    %v1798 = vmax.f32 %v1796, %v1797
    %v1799 = vrot.slane %v1798, 2
    %v1800 = vmax.f32 %v1798, %v1799
    %v1801 = vrot.slane %v1800, 1
    %v1802 = vmax.f32 %v1800, %v1801
    %v1803 = vsel %vm652, %v1755, -inf
    %v1804 = vrot.slane %v1803, 4
    %v1805 = vmax.f32 %v1803, %v1804
    %v1806 = vrot.slane %v1805, 2
    %v1807 = vmax.f32 %v1805, %v1806
    %v1808 = vrot.slane %v1807, 1
    %v1809 = vmax.f32 %v1807, %v1808
    %v1810 = vsel %vm652, %v1769, -inf
    %v1811 = vrot.slane %v1810, 4
    %v1812 = vmax.f32 %v1810, %v1811
    %v1813 = vrot.slane %v1812, 2
    %v1814 = vmax.f32 %v1812, %v1813
    %v1815 = vrot.slane %v1814, 1
    %v1816 = vmax.f32 %v1814, %v1815
    %v1817 = vsel %vm652, %v1760, -inf
    %v1818 = vrot.slane %v1817, 4
    %v1819 = vmax.f32 %v1817, %v1818
    %v1820 = vrot.slane %v1819, 2
    %v1821 = vmax.f32 %v1819, %v1820
    %v1822 = vrot.slane %v1821, 1
    %v1823 = vmax.f32 %v1821, %v1822
    %v1824 = vsel %vm652, %v1770, -inf
    %v1825 = vrot.slane %v1824, 4
    %v1826 = vmax.f32 %v1824, %v1825
    %v1827 = vrot.slane %v1826, 2
    %v1828 = vmax.f32 %v1826, %v1827
    %v1829 = vrot.slane %v1828, 1
    %v1830 = vmax.f32 %v1828, %v1829
    %v1831 = vsub.f32 %v1745, %v1781
    %v1832 = vsub.f32 %v1767, %v1788
    %v1833 = vsub.f32 %v1750, %v1795
    %v1834 = vsub.f32 %v1768, %v1802
    %v1835 = vsub.f32 %v1755, %v1809
    %v1836 = vsub.f32 %v1769, %v1816
    %v1837 = vsub.f32 %v1760, %v1823
    %v1838 = vsub.f32 %v1770, %v1830
    %v1839 = vmul.f32 %v1831, 1.442695
    %v1840 = vpow.pop %v1839
    %v1841 = vmul.f32 %v1832, 1.442695
    %v1842 = vpow.pop %v1841
    %v1843 = vmul.f32 %v1833, 1.442695
    %v1844 = vpow.pop %v1843
    %v1845 = vmul.f32 %v1834, 1.442695
    %v1846 = vpow.pop %v1845
    %v1847 = vmul.f32 %v1835, 1.442695
    %v1848 = vpow.pop %v1847
    %v1849 = vmul.f32 %v1836, 1.442695
    %v1850 = vpow.pop %v1849
    %v1851 = vmul.f32 %v1837, 1.442695
    %v1852 = vpow.pop %v1851
    %v1853 = vmul.f32 %v1838, 1.442695
    %v1854 = vpow.pop %v1853
    %v1855 = vsel %vm652, %v1840, 0.0
    %v1856 = vrot.slane %v1855, 4
    %v1857 = vadd.f32 %v1855, %v1856
    %v1858 = vrot.slane %v1857, 2
    %v1859 = vadd.f32 %v1857, %v1858
    %v1860 = vrot.slane %v1859, 1
    %v1861 = vadd.f32 %v1859, %v1860
    %v1862 = vsel %vm652, %v1842, 0.0
    %v1863 = vrot.slane %v1862, 4
    %v1864 = vadd.f32 %v1862, %v1863
    %v1865 = vrot.slane %v1864, 2
    %v1866 = vadd.f32 %v1864, %v1865
    %v1867 = vrot.slane %v1866, 1
    %v1868 = vadd.f32 %v1866, %v1867
    %v1869 = vsel %vm652, %v1844, 0.0
    %v1870 = vrot.slane %v1869, 4
    %v1871 = vadd.f32 %v1869, %v1870
    %v1872 = vrot.slane %v1871, 2
    %v1873 = vadd.f32 %v1871, %v1872
    %v1874 = vrot.slane %v1873, 1
    %v1875 = vadd.f32 %v1873, %v1874
    %v1876 = vsel %vm652, %v1846, 0.0
    %v1877 = vrot.slane %v1876, 4
    %v1878 = vadd.f32 %v1876, %v1877
    %v1879 = vrot.slane %v1878, 2
    %v1880 = vadd.f32 %v1878, %v1879
    %v1881 = vrot.slane %v1880, 1
    %v1882 = vadd.f32 %v1880, %v1881
    %v1883 = vsel %vm652, %v1848, 0.0
    %v1884 = vrot.slane %v1883, 4
    %v1885 = vadd.f32 %v1883, %v1884
    %v1886 = vrot.slane %v1885, 2
    %v1887 = vadd.f32 %v1885, %v1886
    %v1888 = vrot.slane %v1887, 1
    %v1889 = vadd.f32 %v1887, %v1888
    %v1890 = vsel %vm652, %v1850, 0.0
    %v1891 = vrot.slane %v1890, 4
    %v1892 = vadd.f32 %v1890, %v1891
    %v1893 = vrot.slane %v1892, 2
    %v1894 = vadd.f32 %v1892, %v1893
    %v1895 = vrot.slane %v1894, 1
    %v1896 = vadd.f32 %v1894, %v1895
    %v1897 = vsel %vm652, %v1852, 0.0
    %v1898 = vrot.slane %v1897, 4
    %v1899 = vadd.f32 %v1897, %v1898
    %v1900 = vrot.slane %v1899, 2
    %v1901 = vadd.f32 %v1899, %v1900
    %v1902 = vrot.slane %v1901, 1
    %v1903 = vadd.f32 %v1901, %v1902
    %v1904 = vsel %vm652, %v1854, 0.0
    %v1905 = vrot.slane %v1904, 4
    %v1906 = vadd.f32 %v1904, %v1905
    %v1907 = vrot.slane %v1906, 2
    %v1908 = vadd.f32 %v1906, %v1907
    %v1909 = vrot.slane %v1908, 1
    %v1910 = vadd.f32 %v1908, %v1909
    %v1911 = vrcp.pop %v1861
    %v1912 = vmul.f32 %v1840, %v1911
    %v1913 = vrcp.pop %v1868
    %v1914 = vmul.f32 %v1842, %v1913
    %v1915 = vrcp.pop %v1875
    %v1916 = vmul.f32 %v1844, %v1915
    %v1917 = vrcp.pop %v1882
    %v1918 = vmul.f32 %v1846, %v1917
    %v1919 = vrcp.pop %v1889
    %v1920 = vmul.f32 %v1848, %v1919
    %v1921 = vrcp.pop %v1896
    %v1922 = vmul.f32 %v1850, %v1921
    %v1923 = vrcp.pop %v1903
    %v1924 = vmul.f32 %v1852, %v1923
    %v1925 = vrcp.pop %v1910
    %v1926 = vmul.f32 %v1854, %v1925
    %v1928 = vcombine.high %v1556, %v1556
    %v1930 = vmul.f32 %v1912, %v1556
    %v1931 = vmul.f32 %v1914, %v1556
    %v1932 = vmul.f32 %v1916, %v1556
    %v1933 = vmul.f32 %v1918, %v1556
    %v1934 = vmul.f32 %v1920, %v1928
    %v1935 = vmul.f32 %v1922, %v1928
    %v1936 = vmul.f32 %v1924, %v1928
    %v1937 = vmul.f32 %v1926, %v1928
    %v1938 = vsel %vm652, %v1930, 0.0
    %v1939 = vrot.slane %v1938, 4
    %v1940 = vadd.f32 %v1938, %v1939
    %v1941 = vrot.slane %v1940, 2
    %v1942 = vadd.f32 %v1940, %v1941
    %v1943 = vrot.slane %v1942, 1
    %v1944 = vadd.f32 %v1942, %v1943
    %v1945 = vsel %vm652, %v1931, 0.0
    %v1946 = vrot.slane %v1945, 4
    %v1947 = vadd.f32 %v1945, %v1946
    %v1948 = vrot.slane %v1947, 2
    %v1949 = vadd.f32 %v1947, %v1948
    %v1950 = vrot.slane %v1949, 1
    %v1951 = vadd.f32 %v1949, %v1950
    %v1952 = vsel %vm652, %v1932, 0.0
    %v1953 = vrot.slane %v1952, 4
    %v1954 = vadd.f32 %v1952, %v1953
    %v1955 = vrot.slane %v1954, 2
    %v1956 = vadd.f32 %v1954, %v1955
    %v1957 = vrot.slane %v1956, 1
    %v1958 = vadd.f32 %v1956, %v1957
    %v1959 = vsel %vm652, %v1933, 0.0
    %v1960 = vrot.slane %v1959, 4
    %v1961 = vadd.f32 %v1959, %v1960
    %v1962 = vrot.slane %v1961, 2
    %v1963 = vadd.f32 %v1961, %v1962
    %v1964 = vrot.slane %v1963, 1
    %v1965 = vadd.f32 %v1963, %v1964
    %v1966 = vsel %vm652, %v1934, 0.0
    %v1967 = vrot.slane %v1966, 4
    %v1968 = vadd.f32 %v1966, %v1967
    %v1969 = vrot.slane %v1968, 2
    %v1970 = vadd.f32 %v1968, %v1969
    %v1971 = vrot.slane %v1970, 1
    %v1972 = vadd.f32 %v1970, %v1971
    %v1973 = vsel %vm652, %v1935, 0.0
    %v1974 = vrot.slane %v1973, 4
    %v1975 = vadd.f32 %v1973, %v1974
    %v1976 = vrot.slane %v1975, 2
    %v1977 = vadd.f32 %v1975, %v1976
    %v1978 = vrot.slane %v1977, 1
    %v1979 = vadd.f32 %v1977, %v1978
    %v1980 = vsel %vm652, %v1936, 0.0
    %v1981 = vrot.slane %v1980, 4
    %v1982 = vadd.f32 %v1980, %v1981
    %v1983 = vrot.slane %v1982, 2
    %v1984 = vadd.f32 %v1982, %v1983
    %v1985 = vrot.slane %v1984, 1
    %v1986 = vadd.f32 %v1984, %v1985
    %v1987 = vsel %vm652, %v1937, 0.0
    %v1988 = vrot.slane %v1987, 4
    %v1989 = vadd.f32 %v1987, %v1988
    %v1990 = vrot.slane %v1989, 2
    %v1991 = vadd.f32 %v1989, %v1990
    %v1992 = vrot.slane %v1991, 1
    %v1993 = vadd.f32 %v1991, %v1992
    %v1994 = vpack.c.bf16 %v1944, %v1944
    %v1995 = vpack.c.bf16 %v1951, %v1951
    %v1996 = vpack.c.bf16 %v1958, %v1958
    %v1997 = vpack.c.bf16 %v1965, %v1965
    %v1998 = vpack.c.bf16 %v1972, %v1972
    %v1999 = vpack.c.bf16 %v1979, %v1979
    %v2000 = vpack.c.bf16 %v1986, %v1986
    %v2001 = vpack.c.bf16 %v1993, %v1993
    %v2002 = vlaneseq
    %v2003 = vshrl.u32 %v2002, 7
    %v2004 = vsub.s32 0, %v2003
    %v2005 = vrot.slane %v1328, %v2004
    %v2014 = vunpack.c.l.b16 %v1994
    %v2015 = vunpack.c.l.b16 %v1995
    %v2016 = vunpack.c.l.b16 %v1996
    %v2017 = vunpack.c.l.b16 %v1997
    %v2018 = vunpack.c.l.b16 %v1998
    %v2019 = vunpack.c.l.b16 %v1999
    %v2020 = vunpack.c.l.b16 %v2000
    %v2021 = vunpack.c.l.b16 %v2001
    %v2022 = vsel %vm900, %v2015, %v2014
    %v2023 = vsel %vm902, %v2016, %v2022
    %v2024 = vsel %vm904, %v2017, %v2023
    %v2025 = vsel %vm906, %v2018, %v2024
    %v2026 = vsel %vm908, %v2019, %v2025
    %v2027 = vsel %vm910, %v2020, %v2026
    %v2028 = vsel %vm912, %v2021, %v2027
    %v2029 = vpack.c.b16 %v2028, %v2028
    %v2047 = vunpack.c.l.b16 %v1277
    %v2048 = vunpack.c.l.b16 %v1278
    %v2049 = vunpack.c.l.b16 %v1279
    %v2050 = vunpack.c.l.b16 %v1280
    %v2051 = vunpack.c.l.b16 %v1281
    %v2052 = vunpack.c.l.b16 %v1282
    %v2053 = vunpack.c.l.b16 %v1283
    %v2054 = vunpack.c.l.b16 %v1284
    %v2055 = vunpack.c.l.b16 %v1285
    %v2056 = vunpack.c.l.b16 %v1286
    %v2057 = vunpack.c.l.b16 %v1287
    %v2058 = vunpack.c.l.b16 %v1288
    %v2059 = vunpack.c.l.b16 %v1289
    %v2060 = vunpack.c.l.b16 %v1290
    %v2061 = vunpack.c.l.b16 %v1291
    %v2062 = vunpack.c.l.b16 %v1292
    %v2063 = vpack.c.b16 %v2048, %v2047
    %v2064 = vpack.c.b16 %v2050, %v2049
    %v2065 = vpack.c.b16 %v2052, %v2051
    %v2066 = vpack.c.b16 %v2054, %v2053
    %v2067 = vpack.c.b16 %v2056, %v2055
    %v2068 = vpack.c.b16 %v2058, %v2057
    %v2069 = vpack.c.b16 %v2060, %v2059
    %v2070 = vpack.c.b16 %v2062, %v2061
    %2079 = vmatprep.subr.bf16.mxu0 0
    %2080 = vmatpush1.bf16.msra.mxu0 %v2070
    %2081 = vmatprep.subr.bf16.mxu0 0
    %2082 = vmatpush1.bf16.msra.mxu0 %v2069
    %2083 = vmatprep.subr.bf16.mxu0 0
    %2084 = vmatpush1.bf16.msra.mxu0 %v2068
    %2085 = vmatprep.subr.bf16.mxu0 0
    %2086 = vmatpush1.bf16.msra.mxu0 %v2067
    %2087 = vmatprep.subr.bf16.mxu0 0
    %2088 = vmatpush1.bf16.msra.mxu0 %v2066
    %2089 = vmatprep.subr.bf16.mxu0 0
    %2090 = vmatpush1.bf16.msra.mxu0 %v2065
    %2091 = vmatprep.subr.bf16.mxu0 0
    %2092 = vmatpush1.bf16.msra.mxu0 %v2064
    %2093 = vmatprep.subr.bf16.mxu0 0
    %2094 = vmatpush1.bf16.msra.mxu0 %v2063
    %2095 = vmatprep.subr.bf16.mxu0 0
    %2096 = vmatpush2.bf16.msra.mxu0 0
    %2097 = vmatprep.subr.bf16.mxu0 0
    %2098 = vmatpush2.bf16.msra.mxu0 0
    %2099 = vmatprep.subr.bf16.mxu0 0
    %2100 = vmatpush2.bf16.msra.mxu0 0
    %2101 = vmatprep.subr.bf16.mxu0 0
    %2102 = vmatpush2.bf16.msra.mxu0 0
    %2103 = vmatprep.subr.bf16.mxu0 0
    %2104 = vmatpush2.bf16.msra.mxu0 0
    %2105 = vmatprep.subr.bf16.mxu0 0
    %2106 = vmatpush2.bf16.msra.mxu0 0
    %2107 = vmatprep.subr.bf16.mxu0 0
    %2108 = vmatpush2.bf16.msra.mxu0 0
    %2109 = vmatprep.subr.bf16.mxu0 0
    %2110 = vmatpush2.bf16.msra.mxu0 0
    %2111 = vmatprep.mubr.bf16.mxu0 0
    %2112 = vmatmul.mubr.bf16.gmra.mxu0 %v2029
    %v2113 = vpop.f32.mrf.mxu0
    %v2114 = vadd.f32 %v2005, %v2113
    %v2115 = vpop.f32.mrf.mxu0
    %v2116 = vpop.f32.mrf.mxu0
    %v2117 = vpop.f32.mrf.mxu0
    %2118 = vdwg.mxu0
    %v2119 = vadd.f32 %v1243, %v2114
    %2120 = vadd.xlane.f32.xlu0 %v2119
    %v2121 = vpop.xlane.xlu0 %2120
    %v2122 = vmul.f32 %v2121, %v1007
    %v2123 = vsub.f32 %v2119, %v2122
    %v2124 = vmul.f32 %v2123, %v2123
    %2125 = vadd.xlane.f32.xlu0 %v2124
    %v2126 = vpop.xlane.xlu0 %2125
    %v2127 = vmul.f32 %v2126, %v1007
    %v2128 = vadd.f32 %v2127, 1e-05
    %v2129 = vrsqrt.pop %v2128
    %v2130 = vmul.f32 %v2123, %v2129
    %v2131 = vlaneseq
    %v2132 = vshrl.u32 %v2131, 7
    %v2133 = vsub.s32 0, %v2132
    %v2134 = vrot.slane %v1331, %v2133
    %v2135 = vmul.f32 %v2130, %v2134
    %v2136 = vlaneseq
    %v2137 = vshrl.u32 %v2136, 7
    %v2138 = vsub.s32 0, %v2137
    %v2139 = vrot.slane %v1332, %v2138
    %v2140 = vadd.f32 %v2135, %v2139
    %v2141 = vpack.c.bf16 %v2140, %v2140
    %v2142 = vlaneseq
    %v2143 = vshrl.u32 %v2142, 7
    %v2144 = vsub.s32 0, %v2143
    %v2145 = vrot.slane %v1329, %v2144
    %v2162 = vunpack.c.l.b16 %v1293
    %v2163 = vunpack.c.l.b16 %v1294
    %v2164 = vunpack.c.l.b16 %v1295
    %v2165 = vunpack.c.l.b16 %v1296
    %v2166 = vunpack.c.l.b16 %v1297
    %v2167 = vunpack.c.l.b16 %v1298
    %v2168 = vunpack.c.l.b16 %v1299
    %v2169 = vunpack.c.l.b16 %v1300
    %v2170 = vunpack.c.l.b16 %v1301
    %v2171 = vunpack.c.l.b16 %v1302
    %v2172 = vunpack.c.l.b16 %v1303
    %v2173 = vunpack.c.l.b16 %v1304
    %v2174 = vunpack.c.l.b16 %v1305
    %v2175 = vunpack.c.l.b16 %v1306
    %v2176 = vunpack.c.l.b16 %v1307
    %v2177 = vunpack.c.l.b16 %v1308
    %v2178 = vpack.c.b16 %v2163, %v2162
    %v2179 = vpack.c.b16 %v2165, %v2164
    %v2180 = vpack.c.b16 %v2167, %v2166
    %v2181 = vpack.c.b16 %v2169, %v2168
    %v2182 = vpack.c.b16 %v2171, %v2170
    %v2183 = vpack.c.b16 %v2173, %v2172
    %v2184 = vpack.c.b16 %v2175, %v2174
    %v2185 = vpack.c.b16 %v2177, %v2176
    %2194 = vmatprep.subr.bf16.mxu0 0
    %2195 = vmatpush1.bf16.msra.mxu0 %v2185
    %2196 = vmatprep.subr.bf16.mxu0 0
    %2197 = vmatpush1.bf16.msra.mxu0 %v2184
    %2198 = vmatprep.subr.bf16.mxu0 0
    %2199 = vmatpush1.bf16.msra.mxu0 %v2183
    %2200 = vmatprep.subr.bf16.mxu0 0
    %2201 = vmatpush1.bf16.msra.mxu0 %v2182
    %2202 = vmatprep.subr.bf16.mxu0 0
    %2203 = vmatpush1.bf16.msra.mxu0 %v2181
    %2204 = vmatprep.subr.bf16.mxu0 0
    %2205 = vmatpush1.bf16.msra.mxu0 %v2180
    %2206 = vmatprep.subr.bf16.mxu0 0
    %2207 = vmatpush1.bf16.msra.mxu0 %v2179
    %2208 = vmatprep.subr.bf16.mxu0 0
    %2209 = vmatpush1.bf16.msra.mxu0 %v2178
    %2210 = vmatprep.subr.bf16.mxu0 0
    %2211 = vmatpush2.bf16.msra.mxu0 0
    %2212 = vmatprep.subr.bf16.mxu0 0
    %2213 = vmatpush2.bf16.msra.mxu0 0
    %2214 = vmatprep.subr.bf16.mxu0 0
    %2215 = vmatpush2.bf16.msra.mxu0 0
    %2216 = vmatprep.subr.bf16.mxu0 0
    %2217 = vmatpush2.bf16.msra.mxu0 0
    %2218 = vmatprep.subr.bf16.mxu0 0
    %2219 = vmatpush2.bf16.msra.mxu0 0
    %2220 = vmatprep.subr.bf16.mxu0 0
    %2221 = vmatpush2.bf16.msra.mxu0 0
    %2222 = vmatprep.subr.bf16.mxu0 0
    %2223 = vmatpush2.bf16.msra.mxu0 0
    %2224 = vmatprep.subr.bf16.mxu0 0
    %2225 = vmatpush2.bf16.msra.mxu0 0
    %2226 = vmatprep.mubr.bf16.mxu0 0
    %2227 = vmatmul.mubr.bf16.gmra.mxu0 %v2141
    %v2228 = vpop.f32.mrf.mxu0
    %v2229 = vadd.f32 %v2145, %v2228
    %v2230 = vpop.f32.mrf.mxu0
    %v2231 = vpop.f32.mrf.mxu0
    %v2232 = vpop.f32.mrf.mxu0
    %2233 = vdwg.mxu0
    %v2234 = vmul.f32 %v2229, 0.5
    %v2235 = vmul.f32 %v2229, 0.044715
    %v2236 = vmul.f32 %v2235, %v2229
    %v2237 = vmul.f32 %v2236, %v2229
    %v2238 = vadd.f32 %v2229, %v2237
    %v2239 = vmul.f32 %v2238, 0.7978846
    %v2240 = vtanh.pop %v2239
    %v2241 = vadd.f32 %v2240, 1.0
    %v2242 = vmul.f32 %v2234, %v2241
    %v2243 = vpack.c.bf16 %v2242, %v2242
    %v2244 = vlaneseq
    %v2245 = vshrl.u32 %v2244, 7
    %v2246 = vsub.s32 0, %v2245
    %v2247 = vrot.slane %v1330, %v2246
    %v2264 = vunpack.c.l.b16 %v1309
    %v2265 = vunpack.c.l.b16 %v1310
    %v2266 = vunpack.c.l.b16 %v1311
    %v2267 = vunpack.c.l.b16 %v1312
    %v2268 = vunpack.c.l.b16 %v1313
    %v2269 = vunpack.c.l.b16 %v1314
    %v2270 = vunpack.c.l.b16 %v1315
    %v2271 = vunpack.c.l.b16 %v1316
    %v2272 = vunpack.c.l.b16 %v1317
    %v2273 = vunpack.c.l.b16 %v1318
    %v2274 = vunpack.c.l.b16 %v1319
    %v2275 = vunpack.c.l.b16 %v1320
    %v2276 = vunpack.c.l.b16 %v1321
    %v2277 = vunpack.c.l.b16 %v1322
    %v2278 = vunpack.c.l.b16 %v1323
    %v2279 = vunpack.c.l.b16 %v1324
    %v2280 = vpack.c.b16 %v2265, %v2264
    %v2281 = vpack.c.b16 %v2267, %v2266
    %v2282 = vpack.c.b16 %v2269, %v2268
    %v2283 = vpack.c.b16 %v2271, %v2270
    %v2284 = vpack.c.b16 %v2273, %v2272
    %v2285 = vpack.c.b16 %v2275, %v2274
    %v2286 = vpack.c.b16 %v2277, %v2276
    %v2287 = vpack.c.b16 %v2279, %v2278
    %2296 = vmatprep.subr.bf16.mxu0 0
    %2297 = vmatpush1.bf16.msra.mxu0 %v2287
    %2298 = vmatprep.subr.bf16.mxu0 0
    %2299 = vmatpush1.bf16.msra.mxu0 %v2286
    %2300 = vmatprep.subr.bf16.mxu0 0
    %2301 = vmatpush1.bf16.msra.mxu0 %v2285
    %2302 = vmatprep.subr.bf16.mxu0 0
    %2303 = vmatpush1.bf16.msra.mxu0 %v2284
    %2304 = vmatprep.subr.bf16.mxu0 0
    %2305 = vmatpush1.bf16.msra.mxu0 %v2283
    %2306 = vmatprep.subr.bf16.mxu0 0
    %2307 = vmatpush1.bf16.msra.mxu0 %v2282
    %2308 = vmatprep.subr.bf16.mxu0 0
    %2309 = vmatpush1.bf16.msra.mxu0 %v2281
    %2310 = vmatprep.subr.bf16.mxu0 0
    %2311 = vmatpush1.bf16.msra.mxu0 %v2280
    %2312 = vmatprep.subr.bf16.mxu0 0
    %2313 = vmatpush2.bf16.msra.mxu0 0
    %2314 = vmatprep.subr.bf16.mxu0 0
    %2315 = vmatpush2.bf16.msra.mxu0 0
    %2316 = vmatprep.subr.bf16.mxu0 0
    %2317 = vmatpush2.bf16.msra.mxu0 0
    %2318 = vmatprep.subr.bf16.mxu0 0
    %2319 = vmatpush2.bf16.msra.mxu0 0
    %2320 = vmatprep.subr.bf16.mxu0 0
    %2321 = vmatpush2.bf16.msra.mxu0 0
    %2322 = vmatprep.subr.bf16.mxu0 0
    %2323 = vmatpush2.bf16.msra.mxu0 0
    %2324 = vmatprep.subr.bf16.mxu0 0
    %2325 = vmatpush2.bf16.msra.mxu0 0
    %2326 = vmatprep.subr.bf16.mxu0 0
    %2327 = vmatpush2.bf16.msra.mxu0 0
    %2328 = vmatprep.mubr.bf16.mxu0 0
    %2329 = vmatmul.mubr.bf16.gmra.mxu0 %v2243
    %v2330 = vpop.f32.mrf.mxu0
    %v2331 = vadd.f32 %v2247, %v2330
    %v2332 = vpop.f32.mrf.mxu0
    %v2333 = vpop.f32.mrf.mxu0
    %v2334 = vpop.f32.mrf.mxu0
    %2335 = vdwg.mxu0
    %v2336 = vadd.f32 %v2140, %v2331
    %2337 = vadd.xlane.f32.xlu0 %v2336
    %v2338 = vpop.xlane.xlu0 %2337
    %v2339 = vmul.f32 %v2338, %v1007
    %v2340 = vsub.f32 %v2336, %v2339
    %v2341 = vmul.f32 %v2340, %v2340
    %2342 = vadd.xlane.f32.xlu0 %v2341
    %v2343 = vpop.xlane.xlu0 %2342
    %v2344 = vmul.f32 %v2343, %v1007
    %v2345 = vadd.f32 %v2344, 1e-05
    %v2346 = vrsqrt.pop %v2345
    %v2347 = vmul.f32 %v2340, %v2346
    %v2348 = vlaneseq
    %v2349 = vshrl.u32 %v2348, 7
    %v2350 = vsub.s32 0, %v2349
    %v2351 = vrot.slane %v1333, %v2350
    %v2352 = vmul.f32 %v2347, %v2351
    %v2353 = vlaneseq
    %v2354 = vshrl.u32 %v2353, 7
    %v2355 = vsub.s32 0, %v2354
    %v2356 = vrot.slane %v1334, %v2355
    %v2357 = vadd.f32 %v2352, %v2356
    %v2359 = vunpack.c.l.s4 1935823168
    %v2360 = vunpack.c.0.s8 %v2359
    %v2361 = vlaneseq
    %v2362 = vshrl.u32 %v2361, 7
    %v2363 = vsub.s32 %v2360, %v2362
    %v2364 = vrot.slane %v2357, %v2363
    %v2366 = vcombine.high %v2364, %v2364
    %v2368 = vunpack.c.l.s4 1983009808
    %v2369 = vunpack.c.0.s8 %v2368
    %v2370 = vlaneseq
    %v2371 = vshrl.u32 %v2370, 7
    %v2372 = vsub.s32 %v2369, %v2371
    %v2373 = vrot.slane %v2364, %v2372
    %v2375 = vunpack.c.l.s4 1983009808
    %v2376 = vunpack.c.0.s8 %v2375
    %v2377 = vlaneseq
    %v2378 = vshrl.u32 %v2377, 7
    %v2379 = vsub.s32 %v2376, %v2378
    %v2380 = vrot.slane %v2366, %v2379
    %v2381 = vcombine.high %v2373, %v2373
    %v2382 = vcombine.high %v2380, %v2380
    %v2387 = vpack.c.bf16 %v2373, %v2373
    %v2388 = vpack.c.bf16 %v2381, %v2381
    %v2389 = vpack.c.bf16 %v2380, %v2380
    %v2390 = vpack.c.bf16 %v2382, %v2382
    %v2391 = vld [vmem:[%s7] sm:$0xf]
    %v2392 = vld [vmem:[%s7 + $0x4] sm:$0xf]
    %v2393 = vld [vmem:[%s7 + $0x8] sm:$0xf]
    %v2394 = vld [vmem:[%s7 + $0xc] sm:$0xf]
    %v2395 = vld [vmem:[%s7 + $0x10] sm:$0xf]
    %v2396 = vld [vmem:[%s7 + $0x14] sm:$0xf]
    %v2397 = vld [vmem:[%s7 + $0x18] sm:$0xf]
    %v2398 = vld [vmem:[%s7 + $0x1c] sm:$0xf]
    %v2399 = vld [vmem:[%s7 + $0x20] sm:$0xf]
    %v2400 = vld [vmem:[%s7 + $0x24] sm:$0xf]
    %v2401 = vld [vmem:[%s7 + $0x28] sm:$0xf]
    %v2402 = vld [vmem:[%s7 + $0x2c] sm:$0xf]
    %v2403 = vld [vmem:[%s7 + $0x30] sm:$0xf]
    %v2404 = vld [vmem:[%s7 + $0x34] sm:$0xf]
    %v2405 = vld [vmem:[%s7 + $0x38] sm:$0xf]
    %v2406 = vld [vmem:[%s7 + $0x3c] sm:$0xf]
    %v2407 = vld [vmem:[%s7 + $0x40] sm:$0xf]
    %v2408 = vld [vmem:[%s7 + $0x44] sm:$0xf]
    %v2409 = vld [vmem:[%s7 + $0x48] sm:$0xf]
    %v2410 = vld [vmem:[%s7 + $0x4c] sm:$0xf]
    %v2411 = vld [vmem:[%s7 + $0x50] sm:$0xf]
    %v2412 = vld [vmem:[%s7 + $0x54] sm:$0xf]
    %v2413 = vld [vmem:[%s7 + $0x58] sm:$0xf]
    %v2414 = vld [vmem:[%s7 + $0x5c] sm:$0xf]
    %v2415 = vld [vmem:[%s7 + $0x60] sm:$0xf]
    %v2416 = vld [vmem:[%s7 + $0x64] sm:$0xf]
    %v2417 = vld [vmem:[%s7 + $0x68] sm:$0xf]
    %v2418 = vld [vmem:[%s7 + $0x6c] sm:$0xf]
    %v2419 = vld [vmem:[%s7 + $0x70] sm:$0xf]
    %v2420 = vld [vmem:[%s7 + $0x74] sm:$0xf]
    %v2421 = vld [vmem:[%s7 + $0x78] sm:$0xf]
    %v2422 = vld [vmem:[%s7 + $0x7c] sm:$0xf]
    %v2423 = vld [vmem:[%s7 + $0x80] sm:$0xf]
    %v2424 = vld [vmem:[%s7 + $0x84] sm:$0xf]
    %v2425 = vld [vmem:[%s7 + $0x88] sm:$0xf]
    %v2426 = vld [vmem:[%s7 + $0x8c] sm:$0xf]
    %v2427 = vld [vmem:[%s7 + $0x90] sm:$0xf]
    %v2428 = vld [vmem:[%s7 + $0x94] sm:$0xf]
    %v2429 = vld [vmem:[%s7 + $0x98] sm:$0xf]
    %v2430 = vld [vmem:[%s7 + $0x9c] sm:$0xf]
    %v2431 = vld [vmem:[%s7 + $0xa0] sm:$0xf]
    %v2432 = vld [vmem:[%s7 + $0xa4] sm:$0xf]
    %v2433 = vld [vmem:[%s7 + $0xa8] sm:$0xf]
    %v2434 = vld [vmem:[%s7 + $0xac] sm:$0xf]
    %v2435 = vld [vmem:[%s7 + $0xb0] sm:$0xf]
    %v2436 = vld [vmem:[%s7 + $0xb4] sm:$0xf]
    %v2437 = vld [vmem:[%s7 + $0xb8] sm:$0xf]
    %v2438 = vld [vmem:[%s7 + $0xbc] sm:$0xf]
    %v2439 = vld [vmem:[%s7 + $0xc0] sm:$0xf]
    %v2440 = vld [vmem:[%s7 + $0xc4] sm:$0xf]
    %v2441 = vld [vmem:[%s7 + $0xc8] sm:$0xf]
    %v2442 = vld [vmem:[%s7 + $0xcc] sm:$0xf]
    %v2443 = vld [vmem:[%s7 + $0xd0] sm:$0xf]
    %v2444 = vld [vmem:[%s7 + $0xd4] sm:$0xf]
    %v2445 = vld [vmem:[%s7 + $0xd8] sm:$0xf]
    %v2446 = vld [vmem:[%s7 + $0xdc] sm:$0xf]
    %v2447 = vld [vmem:[%s7 + $0xe0] sm:$0xf]
    %v2448 = vld [vmem:[%s7 + $0xe4] sm:$0xf]
    %v2449 = vld [vmem:[%s7 + $0xe8] sm:$0xf]
    %v2450 = vld [vmem:[%s7 + $0xec] sm:$0xf]
    %v2451 = vld [vmem:[%s7 + $0xf0] sm:$0xf]
    %v2452 = vld [vmem:[%s7 + $0xf4] sm:$0xf]
    %v2453 = vld [vmem:[%s7 + $0xf8] sm:$0xf]
    %v2454 = vld [vmem:[%s7 + $0xfc] sm:$0xf]
    %v2455 = vld [vmem:[%s8] sm:$0x1]
    %v2457 = vlaneseq
    %v2458 = vshrl.u32 %v2457, 7
    %v2459 = vsub.s32 0, %v2458
    %v2460 = vrot.slane %v2455, %v2459
    %v2526 = vunpack.c.l.b16 %v2391
    %v2527 = vunpack.c.l.b16 %v2392
    %v2528 = vunpack.c.l.b16 %v2393
    %v2529 = vunpack.c.l.b16 %v2394
    %v2530 = vunpack.c.l.b16 %v2395
    %v2531 = vunpack.c.l.b16 %v2396
    %v2532 = vunpack.c.l.b16 %v2397
    %v2533 = vunpack.c.l.b16 %v2398
    %v2534 = vunpack.c.l.b16 %v2399
    %v2535 = vunpack.c.l.b16 %v2400
    %v2536 = vunpack.c.l.b16 %v2401
    %v2537 = vunpack.c.l.b16 %v2402
    %v2538 = vunpack.c.l.b16 %v2403
    %v2539 = vunpack.c.l.b16 %v2404
    %v2540 = vunpack.c.l.b16 %v2405
    %v2541 = vunpack.c.l.b16 %v2406
    %v2542 = vunpack.c.l.b16 %v2407
    %v2543 = vunpack.c.l.b16 %v2408
    %v2544 = vunpack.c.l.b16 %v2409
    %v2545 = vunpack.c.l.b16 %v2410
    %v2546 = vunpack.c.l.b16 %v2411
    %v2547 = vunpack.c.l.b16 %v2412
    %v2548 = vunpack.c.l.b16 %v2413
    %v2549 = vunpack.c.l.b16 %v2414
    %v2550 = vunpack.c.l.b16 %v2415
    %v2551 = vunpack.c.l.b16 %v2416
    %v2552 = vunpack.c.l.b16 %v2417
    %v2553 = vunpack.c.l.b16 %v2418
    %v2554 = vunpack.c.l.b16 %v2419
    %v2555 = vunpack.c.l.b16 %v2420
    %v2556 = vunpack.c.l.b16 %v2421
    %v2557 = vunpack.c.l.b16 %v2422
    %v2558 = vunpack.c.l.b16 %v2423
    %v2559 = vunpack.c.l.b16 %v2424
    %v2560 = vunpack.c.l.b16 %v2425
    %v2561 = vunpack.c.l.b16 %v2426
    %v2562 = vunpack.c.l.b16 %v2427
    %v2563 = vunpack.c.l.b16 %v2428
    %v2564 = vunpack.c.l.b16 %v2429
    %v2565 = vunpack.c.l.b16 %v2430
    %v2566 = vunpack.c.l.b16 %v2431
    %v2567 = vunpack.c.l.b16 %v2432
    %v2568 = vunpack.c.l.b16 %v2433
    %v2569 = vunpack.c.l.b16 %v2434
    %v2570 = vunpack.c.l.b16 %v2435
    %v2571 = vunpack.c.l.b16 %v2436
    %v2572 = vunpack.c.l.b16 %v2437
    %v2573 = vunpack.c.l.b16 %v2438
    %v2574 = vunpack.c.l.b16 %v2439
    %v2575 = vunpack.c.l.b16 %v2440
    %v2576 = vunpack.c.l.b16 %v2441
    %v2577 = vunpack.c.l.b16 %v2442
    %v2578 = vunpack.c.l.b16 %v2443
    %v2579 = vunpack.c.l.b16 %v2444
    %v2580 = vunpack.c.l.b16 %v2445
    %v2581 = vunpack.c.l.b16 %v2446
    %v2582 = vunpack.c.l.b16 %v2447
    %v2583 = vunpack.c.l.b16 %v2448
    %v2584 = vunpack.c.l.b16 %v2449
    %v2585 = vunpack.c.l.b16 %v2450
    %v2586 = vunpack.c.l.b16 %v2451
    %v2587 = vunpack.c.l.b16 %v2452
    %v2588 = vunpack.c.l.b16 %v2453
    %v2589 = vunpack.c.l.b16 %v2454
    %v2590 = vpack.c.b16 %v2527, %v2526
    %v2591 = vpack.c.b16 %v2529, %v2528
    %v2592 = vpack.c.b16 %v2531, %v2530
    %v2593 = vpack.c.b16 %v2533, %v2532
    %v2594 = vpack.c.b16 %v2535, %v2534
    %v2595 = vpack.c.b16 %v2537, %v2536
    %v2596 = vpack.c.b16 %v2539, %v2538
    %v2597 = vpack.c.b16 %v2541, %v2540
    %v2598 = vpack.c.b16 %v2543, %v2542
    %v2599 = vpack.c.b16 %v2545, %v2544
    %v2600 = vpack.c.b16 %v2547, %v2546
    %v2601 = vpack.c.b16 %v2549, %v2548
    %v2602 = vpack.c.b16 %v2551, %v2550
    %v2603 = vpack.c.b16 %v2553, %v2552
    %v2604 = vpack.c.b16 %v2555, %v2554
    %v2605 = vpack.c.b16 %v2557, %v2556
    %v2606 = vpack.c.b16 %v2559, %v2558
    %v2607 = vpack.c.b16 %v2561, %v2560
    %v2608 = vpack.c.b16 %v2563, %v2562
    %v2609 = vpack.c.b16 %v2565, %v2564
    %v2610 = vpack.c.b16 %v2567, %v2566
    %v2611 = vpack.c.b16 %v2569, %v2568
    %v2612 = vpack.c.b16 %v2571, %v2570
    %v2613 = vpack.c.b16 %v2573, %v2572
    %v2614 = vpack.c.b16 %v2575, %v2574
    %v2615 = vpack.c.b16 %v2577, %v2576
    %v2616 = vpack.c.b16 %v2579, %v2578
    %v2617 = vpack.c.b16 %v2581, %v2580
    %v2618 = vpack.c.b16 %v2583, %v2582
    %v2619 = vpack.c.b16 %v2585, %v2584
    %v2620 = vpack.c.b16 %v2587, %v2586
    %v2621 = vpack.c.b16 %v2589, %v2588
    %2654 = vmatprep.subr.bf16.mxu0 0
    %2655 = vmatpush1.bf16.msra.mxu0 %v2597
    %2656 = vmatprep.subr.bf16.mxu0 0
    %2657 = vmatpush1.bf16.msra.mxu0 %v2596
    %2658 = vmatprep.subr.bf16.mxu0 0
    %2659 = vmatpush1.bf16.msra.mxu0 %v2595
    %2660 = vmatprep.subr.bf16.mxu0 0
    %2661 = vmatpush1.bf16.msra.mxu0 %v2594
    %2662 = vmatprep.subr.bf16.mxu0 0
    %2663 = vmatpush1.bf16.msra.mxu0 %v2593
    %2664 = vmatprep.subr.bf16.mxu0 0
    %2665 = vmatpush1.bf16.msra.mxu0 %v2592
    %2666 = vmatprep.subr.bf16.mxu0 0
    %2667 = vmatpush1.bf16.msra.mxu0 %v2591
    %2668 = vmatprep.subr.bf16.mxu0 0
    %2669 = vmatpush1.bf16.msra.mxu0 %v2590
    %2670 = vmatprep.subr.bf16.mxu0 0
    %2671 = vmatpush2.bf16.msra.mxu0 %v2605
    %2672 = vmatprep.subr.bf16.mxu0 0
    %2673 = vmatpush2.bf16.msra.mxu0 %v2604
    %2674 = vmatprep.subr.bf16.mxu0 0
    %2675 = vmatpush2.bf16.msra.mxu0 %v2603
    %2676 = vmatprep.subr.bf16.mxu0 0
    %2677 = vmatpush2.bf16.msra.mxu0 %v2602
    %2678 = vmatprep.subr.bf16.mxu0 0
    %2679 = vmatpush2.bf16.msra.mxu0 %v2601
    %2680 = vmatprep.subr.bf16.mxu0 0
    %2681 = vmatpush2.bf16.msra.mxu0 %v2600
    %2682 = vmatprep.subr.bf16.mxu0 0
    %2683 = vmatpush2.bf16.msra.mxu0 %v2599
    %2684 = vmatprep.subr.bf16.mxu0 0
    %2685 = vmatpush2.bf16.msra.mxu0 %v2598
    %2686 = vmatprep.mubr.bf16.mxu0 %v2388
    %2687 = vmatmul.mubr.bf16.gmra.mxu0 %v2387
    %v2688 = vpop.f32.mrf.mxu0
    %v2689 = vadd.f32 %v2460, %v2688
    %v2690 = vpop.f32.mrf.mxu0
    %v2691 = vpop.f32.mrf.mxu0
    %v2692 = vpop.f32.mrf.mxu0
    %2693 = vdwg.mxu0
    %2694 = vmatprep.subr.bf16.mxu0 0
    %2695 = vmatpush1.bf16.msra.mxu0 %v2613
    %2696 = vmatprep.subr.bf16.mxu0 0
    %2697 = vmatpush1.bf16.msra.mxu0 %v2612
    %2698 = vmatprep.subr.bf16.mxu0 0
    %2699 = vmatpush1.bf16.msra.mxu0 %v2611
    %2700 = vmatprep.subr.bf16.mxu0 0
    %2701 = vmatpush1.bf16.msra.mxu0 %v2610
    %2702 = vmatprep.subr.bf16.mxu0 0
    %2703 = vmatpush1.bf16.msra.mxu0 %v2609
    %2704 = vmatprep.subr.bf16.mxu0 0
    %2705 = vmatpush1.bf16.msra.mxu0 %v2608
    %2706 = vmatprep.subr.bf16.mxu0 0
    %2707 = vmatpush1.bf16.msra.mxu0 %v2607
    %2708 = vmatprep.subr.bf16.mxu0 0
    %2709 = vmatpush1.bf16.msra.mxu0 %v2606
    %2710 = vmatprep.subr.bf16.mxu0 0
    %2711 = vmatpush2.bf16.msra.mxu0 %v2621
    %2712 = vmatprep.subr.bf16.mxu0 0
    %2713 = vmatpush2.bf16.msra.mxu0 %v2620
    %2714 = vmatprep.subr.bf16.mxu0 0
    %2715 = vmatpush2.bf16.msra.mxu0 %v2619
    %2716 = vmatprep.subr.bf16.mxu0 0
    %2717 = vmatpush2.bf16.msra.mxu0 %v2618
    %2718 = vmatprep.subr.bf16.mxu0 0
    %2719 = vmatpush2.bf16.msra.mxu0 %v2617
    %2720 = vmatprep.subr.bf16.mxu0 0
    %2721 = vmatpush2.bf16.msra.mxu0 %v2616
    %2722 = vmatprep.subr.bf16.mxu0 0
    %2723 = vmatpush2.bf16.msra.mxu0 %v2615
    %2724 = vmatprep.subr.bf16.mxu0 0
    %2725 = vmatpush2.bf16.msra.mxu0 %v2614
    %2726 = vmatprep.mubr.bf16.mxu0 %v2390
    %2727 = vmatmul.mubr.bf16.gmra.mxu0 %v2389
    %v2728 = vpop.f32.mrf.mxu0
    %v2729 = vadd.f32 %v2689, %v2728
    %v2730 = vpop.f32.mrf.mxu0
    %v2731 = vpop.f32.mrf.mxu0
    %v2732 = vpop.f32.mrf.mxu0
    %2733 = vdwg.mxu0
    %vm2734 = vcmask 123904
    %2735 = vst.msk [vmem:[%s9] sm:$0x3] %vm2734, %v2729
    // Predicated region
    $region42: #{itransformer_forward.1} parent=1 // pred_check
      _
    $region43: #{itransformer_forward.1} parent=1 // pred_check_branch
      %2737 = sbr.rel (0) target = $region45
    $region44: #{itransformer_forward.1} parent=1 // pred_region
      _
    $region45: #{itransformer_forward.1} parent=1 // pred_fallthru
      _
    // Predicated region
    $region46: #{itransformer_forward.1} parent=1 // pred_check
      _
    $region47: #{itransformer_forward.1} parent=1 // pred_check_branch
      %2739 = sbr.rel (0) target = $region49
    $region48: #{itransformer_forward.1} parent=1 // pred_region
      _
    $region49: #{itransformer_forward.1} parent=1 // pred_fallthru
      _
    %2740 = vsyncpa [#allocation3], 1

</llo_original>
